<compile_context>
chip_gen: v7x
topology: tpu7x:2x2x1
jax: 0.10.0
libtpu: 0.0.40
codegen_flags: <defaults>
</compile_context>

<pallas_src>
import functools

import jax
import jax.numpy as jnp
from jax.experimental import pallas as pl
from jax.experimental.pallas import tpu as pltpu


def _full_spec(shape):
    n = len(shape)
    return pl.BlockSpec(shape, lambda i, _n=n: (0,) * _n)


# ---------------- fused kernel ----------------

def fused_c_kernel(x_ref, w_ref, o_ref, *, H, W):
    """x_ref : VMEM (B, C, T, H*W) float32   (lane-dense: H*W on lanes, T on sublanes)
       w_ref : SMEM (54,)                    Conv3d weight (1, 2, 3, 3, 3) flattened
       o_ref : VMEM (B, C, T, H*W) float32
    """
    B, C, T, HW = x_ref.shape
    inv_c = 1.0 / C
    eps = 1e-5

    # ---- hoisted: 54 scalar weights (one SMEM read each, not per batch) ----
    wts = [w_ref[i] for i in range(2 * 3 * 3 * 3)]

    # ---- hoisted: lane / sublane border masks for the roll-based conv ----
    lane = jax.lax.broadcasted_iota(jnp.int32, (T, HW), 1)
    if W & (W - 1) == 0:
        w_idx = lane & (W - 1)          # avoid vector integer div/mod
    else:
        w_idx = lane % W
    t_idx = jax.lax.broadcasted_iota(jnp.int32, (T, HW), 0)

    offsets = [(dh, dw) for dh in (-1, 0, 1) for dw in (-1, 0, 1)]
    lane_masks = []
    for dh, dw in offsets:
        conds = []
        if dh == -1:
            conds.append(lane >= W)                 # source h-1 >= 0
        if dh == 1:
            conds.append(lane < (H - 1) * W)        # source h+1 <  H
        if dw == -1:
            conds.append(w_idx >= 1)                # source w-1 >= 0
        if dw == 1:
            conds.append(w_idx < W - 1)             # source w+1 <  W
        m = None
        for cnd in conds:
            m = cnd if m is None else (m & cnd)
        lane_masks.append(m)                        # None == all valid (dh=dw=0)

    keep_hi = t_idx < (T - 1)     # rows valid after pulling from t+1
    keep_lo = t_idx >= 1          # rows valid after pulling from t-1

    total_sum = 0.0
    total_sq = 0.0
    conv_list = []

    for b in range(B):
        # ---- 1) channel max / mean pool on dense (T, H*W) tiles ----
        xc = x_ref[b, 0]
        xmax = xc
        xsum = xc
        for ci in range(1, C):
            xc = x_ref[b, ci]
            xmax = jnp.maximum(xmax, xc)
            xsum = xsum + xc
        y = (xmax, xsum * inv_c)          # conv input channels: (max, mean)

        # ---- 2) Conv3d 3x3x3 (Cin=2 -> Cout=1, pad 1) via rolls + masks ----
        # q[kt] accumulates the per-t-tap partials; h/w shifts are lane rolls.
        q = [jnp.zeros((T, HW), jnp.float32) for _ in range(3)]
        for dc in range(2):
            for j, (dh, dw) in enumerate(offsets):
                d = dh * W + dw
                s = y[dc] if d == 0 else pltpu.roll(y[dc], shift=(-d) % HW, axis=1)
                if lane_masks[j] is not None:
                    s = jnp.where(lane_masks[j], s, 0.0)
                for kt in range(3):
                    widx = ((dc * 3 + kt) * 3 + (dh + 1)) * 3 + (dw + 1)
                    q[kt] = q[kt] + wts[widx] * s

        # t dimension: conv[t] = q[1][t] + q[2][t+1] + q[0][t-1]  (zero outside)
        conv_b = q[1]
        up = pltpu.roll(q[2], shift=T - 1, axis=0)      # row t <- q[2][t+1]
        conv_b = conv_b + jnp.where(keep_hi, up, 0.0)
        down = pltpu.roll(q[0], shift=1, axis=0)        # row t <- q[0][t-1]
        conv_b = conv_b + jnp.where(keep_lo, down, 0.0)
        conv_list.append(conv_b)

        # ---- 3) one-pass BN batch-stats accumulation ----
        total_sum = total_sum + jnp.sum(conv_b)
        total_sq = total_sq + jnp.sum(conv_b * conv_b)

    # ---- 4) BatchNorm3d(1), training-mode biased stats, gamma=1, beta=0 ----
    n_elems = float(B * T * HW)
    mean = total_sum / n_elems
    var = total_sq / n_elems - mean * mean
    scale = jax.lax.rsqrt(var + eps)

    # ---- 5) sigmoid gate broadcast over channels (dense full-lane stores) ----
    for b in range(B):
        gate_b = jax.nn.sigmoid((conv_list[b] - mean) * scale)     # (T, H*W)
        for ci in range(C):
            o_ref[b, ci] = x_ref[b, ci] * gate_b


# ---------------- wrapper ----------------

@functools.partial(jax.jit, static_argnames=("num_segments",))
def c_forward(x, conv_w, num_segments=8):
    bn, c, h, w = x.shape
    b = bn // num_segments
    t = num_segments
    hw = h * w

    # lane-dense kernel layout: (B, C, T, H*W); the relayout is cheap wrapper XLA.
    xv = jnp.transpose(x.reshape(b, t, c, h, w).astype(jnp.float32),
                       (0, 2, 1, 3, 4)).reshape(b, c, t, hw)
    w_flat = conv_w.astype(jnp.float32).reshape(-1)     # (2*3*3*3,) = (54,)

    kernel = functools.partial(fused_c_kernel, H=h, W=w)
    out = pl.pallas_call(
        kernel,
        grid=(1,),
        in_specs=[_full_spec(xv.shape),
                  pl.BlockSpec(memory_space=pltpu.SMEM)],
        out_specs=_full_spec(xv.shape),
        out_shape=jax.ShapeDtypeStruct(xv.shape, jnp.float32),
        compiler_params=pltpu.CompilerParams(
            dimension_semantics=("arbitrary",)),
    )(xv, w_flat)

    out = jnp.transpose(out.reshape(b, c, t, h, w),
                        (0, 2, 1, 3, 4)).reshape(bn, c, h, w)
    return out


# ---------------- pure-JAX reference ----------------

def c_forward_reference(x, conv_w, num_segments=8):
    bn, c, h, w = x.shape
    b = bn // num_segments
    xv = x.reshape(b, num_segments, c, h, w).astype(jnp.float32)
    y = jnp.stack([xv.max(axis=2), xv.mean(axis=2)], axis=1)        # (b,2,t,h,w)
    conv = jax.lax.conv_general_dilated(
        y, conv_w.astype(jnp.float32),
        window_strides=(1, 1, 1), padding=((1, 1), (1, 1), (1, 1)),
        dimension_numbers=("NCDHW", "OIDHW", "NCDHW"),
        precision=jax.lax.Precision.HIGHEST)[:, 0]                  # (b,t,h,w)
    mean = conv.mean()
    var = jnp.mean((conv - mean) ** 2)
    gate = jax.nn.sigmoid((conv - mean) / jnp.sqrt(var + 1e-5))
    out = xv * gate[:, :, None, :, :]
    return out.reshape(bn, c, h, w)


if __name__ == "__main__":
    num_segments = 8
    bn, c, h, w = 2 * num_segments, 4, 16, 16        # b=2, t=8

    key = jax.random.PRNGKey(0)
    kx, kwt = jax.random.split(key)
    x = jax.random.normal(kx, (bn, c, h, w), dtype=jnp.float32)
    # Conv3d(2->1, k=3) weight, kaiming_normal_(mode='fan_out', relu): std = sqrt(2/27)
    conv_w = jax.random.normal(kwt, (1, 2, 3, 3, 3), dtype=jnp.float32) * jnp.sqrt(2.0 / 27.0)

    out = jax.block_until_ready(c_forward(x, conv_w, num_segments=num_segments))
    ref = jax.block_until_ready(c_forward_reference(x, conv_w, num_segments))

    assert out.shape == (bn, c, h, w)
    err = float(jnp.max(jnp.abs(out - ref)))
    assert jnp.allclose(out, ref, rtol=1e-4, atol=1e-4), f"max abs err = {err}"
    print("KERNEL_OK")
</pallas_src>

<mosaic_0001>
module attributes {stable_mosaic.version = 11 : i64} {
  func.func @fused_c_kernel(%arg0: i32, %arg1: memref<2x4x8x256xf32, #tpu.memory_space<vmem>>, %arg2: memref<54xf32, #tpu.memory_space<smem>>, %arg3: memref<2x4x8x256xf32, #tpu.memory_space<vmem>>) attributes {dimension_semantics = [#tpu.dimension_semantics<arbitrary>], iteration_bounds = array<i64: 1>, scalar_prefetch = 0 : i64, scratch_operands = 0 : i64, tpu.core_type = #tpu.core_type<tc>, window_params = [{pipeline_mode = #tpu.pipeline_mode<synchronous>, transform_indices = @transform_0, window_bounds = array<i64: 2, 4, 8, 256>}, {transform_indices = @transform_1, window_bounds = array<i64: 54>}, {pipeline_mode = #tpu.pipeline_mode<synchronous>, transform_indices = @transform_2, window_bounds = array<i64: 2, 4, 8, 256>}]} {
    %c0 = arith.constant 0 : index
    %0 = memref.load %arg2[%c0] : memref<54xf32, #tpu.memory_space<smem>>
    %c1 = arith.constant 1 : index
    %1 = memref.load %arg2[%c1] : memref<54xf32, #tpu.memory_space<smem>>
    %c2 = arith.constant 2 : index
    %2 = memref.load %arg2[%c2] : memref<54xf32, #tpu.memory_space<smem>>
    %c3 = arith.constant 3 : index
    %3 = memref.load %arg2[%c3] : memref<54xf32, #tpu.memory_space<smem>>
    %c4 = arith.constant 4 : index
    %4 = memref.load %arg2[%c4] : memref<54xf32, #tpu.memory_space<smem>>
    %c5 = arith.constant 5 : index
    %5 = memref.load %arg2[%c5] : memref<54xf32, #tpu.memory_space<smem>>
    %c6 = arith.constant 6 : index
    %6 = memref.load %arg2[%c6] : memref<54xf32, #tpu.memory_space<smem>>
    %c7 = arith.constant 7 : index
    %7 = memref.load %arg2[%c7] : memref<54xf32, #tpu.memory_space<smem>>
    %c8 = arith.constant 8 : index
    %8 = memref.load %arg2[%c8] : memref<54xf32, #tpu.memory_space<smem>>
    %c9 = arith.constant 9 : index
    %9 = memref.load %arg2[%c9] : memref<54xf32, #tpu.memory_space<smem>>
    %c10 = arith.constant 10 : index
    %10 = memref.load %arg2[%c10] : memref<54xf32, #tpu.memory_space<smem>>
    %c11 = arith.constant 11 : index
    %11 = memref.load %arg2[%c11] : memref<54xf32, #tpu.memory_space<smem>>
    %c12 = arith.constant 12 : index
    %12 = memref.load %arg2[%c12] : memref<54xf32, #tpu.memory_space<smem>>
    %c13 = arith.constant 13 : index
    %13 = memref.load %arg2[%c13] : memref<54xf32, #tpu.memory_space<smem>>
    %c14 = arith.constant 14 : index
    %14 = memref.load %arg2[%c14] : memref<54xf32, #tpu.memory_space<smem>>
    %c15 = arith.constant 15 : index
    %15 = memref.load %arg2[%c15] : memref<54xf32, #tpu.memory_space<smem>>
    %c16 = arith.constant 16 : index
    %16 = memref.load %arg2[%c16] : memref<54xf32, #tpu.memory_space<smem>>
    %c17 = arith.constant 17 : index
    %17 = memref.load %arg2[%c17] : memref<54xf32, #tpu.memory_space<smem>>
    %c18 = arith.constant 18 : index
    %18 = memref.load %arg2[%c18] : memref<54xf32, #tpu.memory_space<smem>>
    %c19 = arith.constant 19 : index
    %19 = memref.load %arg2[%c19] : memref<54xf32, #tpu.memory_space<smem>>
    %c20 = arith.constant 20 : index
    %20 = memref.load %arg2[%c20] : memref<54xf32, #tpu.memory_space<smem>>
    %c21 = arith.constant 21 : index
    %21 = memref.load %arg2[%c21] : memref<54xf32, #tpu.memory_space<smem>>
    %c22 = arith.constant 22 : index
    %22 = memref.load %arg2[%c22] : memref<54xf32, #tpu.memory_space<smem>>
    %c23 = arith.constant 23 : index
    %23 = memref.load %arg2[%c23] : memref<54xf32, #tpu.memory_space<smem>>
    %c24 = arith.constant 24 : index
    %24 = memref.load %arg2[%c24] : memref<54xf32, #tpu.memory_space<smem>>
    %c25 = arith.constant 25 : index
    %25 = memref.load %arg2[%c25] : memref<54xf32, #tpu.memory_space<smem>>
    %c26 = arith.constant 26 : index
    %26 = memref.load %arg2[%c26] : memref<54xf32, #tpu.memory_space<smem>>
    %c27 = arith.constant 27 : index
    %27 = memref.load %arg2[%c27] : memref<54xf32, #tpu.memory_space<smem>>
    %c28 = arith.constant 28 : index
    %28 = memref.load %arg2[%c28] : memref<54xf32, #tpu.memory_space<smem>>
    %c29 = arith.constant 29 : index
    %29 = memref.load %arg2[%c29] : memref<54xf32, #tpu.memory_space<smem>>
    %c30 = arith.constant 30 : index
    %30 = memref.load %arg2[%c30] : memref<54xf32, #tpu.memory_space<smem>>
    %c31 = arith.constant 31 : index
    %31 = memref.load %arg2[%c31] : memref<54xf32, #tpu.memory_space<smem>>
    %c32 = arith.constant 32 : index
    %32 = memref.load %arg2[%c32] : memref<54xf32, #tpu.memory_space<smem>>
    %c33 = arith.constant 33 : index
    %33 = memref.load %arg2[%c33] : memref<54xf32, #tpu.memory_space<smem>>
    %c34 = arith.constant 34 : index
    %34 = memref.load %arg2[%c34] : memref<54xf32, #tpu.memory_space<smem>>
    %c35 = arith.constant 35 : index
    %35 = memref.load %arg2[%c35] : memref<54xf32, #tpu.memory_space<smem>>
    %c36 = arith.constant 36 : index
    %36 = memref.load %arg2[%c36] : memref<54xf32, #tpu.memory_space<smem>>
    %c37 = arith.constant 37 : index
    %37 = memref.load %arg2[%c37] : memref<54xf32, #tpu.memory_space<smem>>
    %c38 = arith.constant 38 : index
    %38 = memref.load %arg2[%c38] : memref<54xf32, #tpu.memory_space<smem>>
    %c39 = arith.constant 39 : index
    %39 = memref.load %arg2[%c39] : memref<54xf32, #tpu.memory_space<smem>>
    %c40 = arith.constant 40 : index
    %40 = memref.load %arg2[%c40] : memref<54xf32, #tpu.memory_space<smem>>
    %c41 = arith.constant 41 : index
    %41 = memref.load %arg2[%c41] : memref<54xf32, #tpu.memory_space<smem>>
    %c42 = arith.constant 42 : index
    %42 = memref.load %arg2[%c42] : memref<54xf32, #tpu.memory_space<smem>>
    %c43 = arith.constant 43 : index
    %43 = memref.load %arg2[%c43] : memref<54xf32, #tpu.memory_space<smem>>
    %c44 = arith.constant 44 : index
    %44 = memref.load %arg2[%c44] : memref<54xf32, #tpu.memory_space<smem>>
    %c45 = arith.constant 45 : index
    %45 = memref.load %arg2[%c45] : memref<54xf32, #tpu.memory_space<smem>>
    %c46 = arith.constant 46 : index
    %46 = memref.load %arg2[%c46] : memref<54xf32, #tpu.memory_space<smem>>
    %c47 = arith.constant 47 : index
    %47 = memref.load %arg2[%c47] : memref<54xf32, #tpu.memory_space<smem>>
    %c48 = arith.constant 48 : index
    %48 = memref.load %arg2[%c48] : memref<54xf32, #tpu.memory_space<smem>>
    %c49 = arith.constant 49 : index
    %49 = memref.load %arg2[%c49] : memref<54xf32, #tpu.memory_space<smem>>
    %c50 = arith.constant 50 : index
    %50 = memref.load %arg2[%c50] : memref<54xf32, #tpu.memory_space<smem>>
    %c51 = arith.constant 51 : index
    %51 = memref.load %arg2[%c51] : memref<54xf32, #tpu.memory_space<smem>>
    %c52 = arith.constant 52 : index
    %52 = memref.load %arg2[%c52] : memref<54xf32, #tpu.memory_space<smem>>
    %c53 = arith.constant 53 : index
    %53 = memref.load %arg2[%c53] : memref<54xf32, #tpu.memory_space<smem>>
    %54 = tpu.iota {dimensions = array<i32: 1>} : vector<8x256xi32>
    %c15_i32 = arith.constant 15 : i32
    %55 = vector.broadcast %c15_i32 : i32 to vector<8x256xi32>
    %56 = arith.andi %54, %55 : vector<8x256xi32>
    %57 = tpu.iota {dimensions = array<i32: 0>} : vector<8x256xi32>
    %c16_i32 = arith.constant 16 : i32
    %58 = vector.broadcast %c16_i32 : i32 to vector<8x256xi32>
    %59 = arith.cmpi sge, %54, %58 : vector<8x256xi32>
    %c1_i32 = arith.constant 1 : i32
    %60 = vector.broadcast %c1_i32 : i32 to vector<8x256xi32>
    %61 = arith.cmpi sge, %56, %60 : vector<8x256xi32>
    %62 = arith.andi %59, %61 : vector<8x256xi1>
    %c16_i32_0 = arith.constant 16 : i32
    %63 = vector.broadcast %c16_i32_0 : i32 to vector<8x256xi32>
    %64 = arith.cmpi sge, %54, %63 : vector<8x256xi32>
    %c16_i32_1 = arith.constant 16 : i32
    %65 = vector.broadcast %c16_i32_1 : i32 to vector<8x256xi32>
    %66 = arith.cmpi sge, %54, %65 : vector<8x256xi32>
    %c15_i32_2 = arith.constant 15 : i32
    %67 = vector.broadcast %c15_i32_2 : i32 to vector<8x256xi32>
    %68 = arith.cmpi slt, %56, %67 : vector<8x256xi32>
    %69 = arith.andi %66, %68 : vector<8x256xi1>
    %c1_i32_3 = arith.constant 1 : i32
    %70 = vector.broadcast %c1_i32_3 : i32 to vector<8x256xi32>
    %71 = arith.cmpi sge, %56, %70 : vector<8x256xi32>
    %c15_i32_4 = arith.constant 15 : i32
    %72 = vector.broadcast %c15_i32_4 : i32 to vector<8x256xi32>
    %73 = arith.cmpi slt, %56, %72 : vector<8x256xi32>
    %c240_i32 = arith.constant 240 : i32
    %74 = vector.broadcast %c240_i32 : i32 to vector<8x256xi32>
    %75 = arith.cmpi slt, %54, %74 : vector<8x256xi32>
    %c1_i32_5 = arith.constant 1 : i32
    %76 = vector.broadcast %c1_i32_5 : i32 to vector<8x256xi32>
    %77 = arith.cmpi sge, %56, %76 : vector<8x256xi32>
    %78 = arith.andi %75, %77 : vector<8x256xi1>
    %c240_i32_6 = arith.constant 240 : i32
    %79 = vector.broadcast %c240_i32_6 : i32 to vector<8x256xi32>
    %80 = arith.cmpi slt, %54, %79 : vector<8x256xi32>
    %c240_i32_7 = arith.constant 240 : i32
    %81 = vector.broadcast %c240_i32_7 : i32 to vector<8x256xi32>
    %82 = arith.cmpi slt, %54, %81 : vector<8x256xi32>
    %c15_i32_8 = arith.constant 15 : i32
    %83 = vector.broadcast %c15_i32_8 : i32 to vector<8x256xi32>
    %84 = arith.cmpi slt, %56, %83 : vector<8x256xi32>
    %85 = arith.andi %82, %84 : vector<8x256xi1>
    %c7_i32 = arith.constant 7 : i32
    %86 = vector.broadcast %c7_i32 : i32 to vector<8x256xi32>
    %87 = arith.cmpi slt, %57, %86 : vector<8x256xi32>
    %c1_i32_9 = arith.constant 1 : i32
    %88 = vector.broadcast %c1_i32_9 : i32 to vector<8x256xi32>
    %89 = arith.cmpi sge, %57, %88 : vector<8x256xi32>
    %c0_10 = arith.constant 0 : index
    %c0_11 = arith.constant 0 : index
    %c0_12 = arith.constant 0 : index
    %c0_13 = arith.constant 0 : index
    %90 = vector.load %arg1[%c0_10, %c0_11, %c0_12, %c0_13] : memref<2x4x8x256xf32, #tpu.memory_space<vmem>>, vector<1x1x8x256xf32>
    %91 = vector.shape_cast %90 : vector<1x1x8x256xf32> to vector<8x256xf32>
    %c0_14 = arith.constant 0 : index
    %c1_15 = arith.constant 1 : index
    %c0_16 = arith.constant 0 : index
    %c0_17 = arith.constant 0 : index
    %92 = vector.load %arg1[%c0_14, %c1_15, %c0_16, %c0_17] : memref<2x4x8x256xf32, #tpu.memory_space<vmem>>, vector<1x1x8x256xf32>
    %93 = vector.shape_cast %92 : vector<1x1x8x256xf32> to vector<8x256xf32>
    %94 = arith.maximumf %91, %93 : vector<8x256xf32>
    %95 = arith.addf %91, %93 : vector<8x256xf32>
    %c0_18 = arith.constant 0 : index
    %c2_19 = arith.constant 2 : index
    %c0_20 = arith.constant 0 : index
    %c0_21 = arith.constant 0 : index
    %96 = vector.load %arg1[%c0_18, %c2_19, %c0_20, %c0_21] : memref<2x4x8x256xf32, #tpu.memory_space<vmem>>, vector<1x1x8x256xf32>
    %97 = vector.shape_cast %96 : vector<1x1x8x256xf32> to vector<8x256xf32>
    %98 = arith.maximumf %94, %97 : vector<8x256xf32>
    %99 = arith.addf %95, %97 : vector<8x256xf32>
    %c0_22 = arith.constant 0 : index
    %c3_23 = arith.constant 3 : index
    %c0_24 = arith.constant 0 : index
    %c0_25 = arith.constant 0 : index
    %100 = vector.load %arg1[%c0_22, %c3_23, %c0_24, %c0_25] : memref<2x4x8x256xf32, #tpu.memory_space<vmem>>, vector<1x1x8x256xf32>
    %101 = vector.shape_cast %100 : vector<1x1x8x256xf32> to vector<8x256xf32>
    %102 = arith.maximumf %98, %101 : vector<8x256xf32>
    %103 = arith.addf %99, %101 : vector<8x256xf32>
    %cst = arith.constant 2.500000e-01 : f32
    %104 = vector.broadcast %cst : f32 to vector<8x256xf32>
    %105 = arith.mulf %103, %104 : vector<8x256xf32>
    %cst_26 = arith.constant 0.000000e+00 : f32
    %106 = vector.broadcast %cst_26 : f32 to vector<8x256xf32>
    %cst_27 = arith.constant 0.000000e+00 : f32
    %107 = vector.broadcast %cst_27 : f32 to vector<8x256xf32>
    %cst_28 = arith.constant 0.000000e+00 : f32
    %108 = vector.broadcast %cst_28 : f32 to vector<8x256xf32>
    %c17_i32 = arith.constant 17 : i32
    %109 = tpu.dynamic_rotate %102 by %c17_i32 dim 1 : vector<8x256xf32>, i32 -> vector<8x256xf32>
    %cst_29 = arith.constant 0.000000e+00 : f32
    %110 = vector.broadcast %cst_29 : f32 to vector<8x256xf32>
    %111 = arith.select %62, %109, %110 : vector<8x256xi1>, vector<8x256xf32>
    %112 = vector.broadcast %0 : f32 to vector<8x256xf32>
    %113 = arith.mulf %112, %111 : vector<8x256xf32>
    %114 = arith.addf %106, %113 : vector<8x256xf32>
    %115 = vector.broadcast %9 : f32 to vector<8x256xf32>
    %116 = arith.mulf %115, %111 : vector<8x256xf32>
    %117 = arith.addf %107, %116 : vector<8x256xf32>
    %118 = vector.broadcast %18 : f32 to vector<8x256xf32>
    %119 = arith.mulf %118, %111 : vector<8x256xf32>
    %120 = arith.addf %108, %119 : vector<8x256xf32>
    %c16_i32_30 = arith.constant 16 : i32
    %121 = tpu.dynamic_rotate %102 by %c16_i32_30 dim 1 : vector<8x256xf32>, i32 -> vector<8x256xf32>
    %cst_31 = arith.constant 0.000000e+00 : f32
    %122 = vector.broadcast %cst_31 : f32 to vector<8x256xf32>
    %123 = arith.select %64, %121, %122 : vector<8x256xi1>, vector<8x256xf32>
    %124 = vector.broadcast %1 : f32 to vector<8x256xf32>
    %125 = arith.mulf %124, %123 : vector<8x256xf32>
    %126 = arith.addf %114, %125 : vector<8x256xf32>
    %127 = vector.broadcast %10 : f32 to vector<8x256xf32>
    %128 = arith.mulf %127, %123 : vector<8x256xf32>
    %129 = arith.addf %117, %128 : vector<8x256xf32>
    %130 = vector.broadcast %19 : f32 to vector<8x256xf32>
    %131 = arith.mulf %130, %123 : vector<8x256xf32>
    %132 = arith.addf %120, %131 : vector<8x256xf32>
    %c15_i32_32 = arith.constant 15 : i32
    %133 = tpu.dynamic_rotate %102 by %c15_i32_32 dim 1 : vector<8x256xf32>, i32 -> vector<8x256xf32>
    %cst_33 = arith.constant 0.000000e+00 : f32
    %134 = vector.broadcast %cst_33 : f32 to vector<8x256xf32>
    %135 = arith.select %69, %133, %134 : vector<8x256xi1>, vector<8x256xf32>
    %136 = vector.broadcast %2 : f32 to vector<8x256xf32>
    %137 = arith.mulf %136, %135 : vector<8x256xf32>
    %138 = arith.addf %126, %137 : vector<8x256xf32>
    %139 = vector.broadcast %11 : f32 to vector<8x256xf32>
    %140 = arith.mulf %139, %135 : vector<8x256xf32>
    %141 = arith.addf %129, %140 : vector<8x256xf32>
    %142 = vector.broadcast %20 : f32 to vector<8x256xf32>
    %143 = arith.mulf %142, %135 : vector<8x256xf32>
    %144 = arith.addf %132, %143 : vector<8x256xf32>
    %c1_i32_34 = arith.constant 1 : i32
    %145 = tpu.dynamic_rotate %102 by %c1_i32_34 dim 1 : vector<8x256xf32>, i32 -> vector<8x256xf32>
    %cst_35 = arith.constant 0.000000e+00 : f32
    %146 = vector.broadcast %cst_35 : f32 to vector<8x256xf32>
    %147 = arith.select %71, %145, %146 : vector<8x256xi1>, vector<8x256xf32>
    %148 = vector.broadcast %3 : f32 to vector<8x256xf32>
    %149 = arith.mulf %148, %147 : vector<8x256xf32>
    %150 = arith.addf %138, %149 : vector<8x256xf32>
    %151 = vector.broadcast %12 : f32 to vector<8x256xf32>
    %152 = arith.mulf %151, %147 : vector<8x256xf32>
    %153 = arith.addf %141, %152 : vector<8x256xf32>
    %154 = vector.broadcast %21 : f32 to vector<8x256xf32>
    %155 = arith.mulf %154, %147 : vector<8x256xf32>
    %156 = arith.addf %144, %155 : vector<8x256xf32>
    %157 = vector.broadcast %4 : f32 to vector<8x256xf32>
    %158 = arith.mulf %157, %102 : vector<8x256xf32>
    %159 = arith.addf %150, %158 : vector<8x256xf32>
    %160 = vector.broadcast %13 : f32 to vector<8x256xf32>
    %161 = arith.mulf %160, %102 : vector<8x256xf32>
    %162 = arith.addf %153, %161 : vector<8x256xf32>
    %163 = vector.broadcast %22 : f32 to vector<8x256xf32>
    %164 = arith.mulf %163, %102 : vector<8x256xf32>
    %165 = arith.addf %156, %164 : vector<8x256xf32>
    %c255_i32 = arith.constant 255 : i32
    %166 = tpu.dynamic_rotate %102 by %c255_i32 dim 1 : vector<8x256xf32>, i32 -> vector<8x256xf32>
    %cst_36 = arith.constant 0.000000e+00 : f32
    %167 = vector.broadcast %cst_36 : f32 to vector<8x256xf32>
    %168 = arith.select %73, %166, %167 : vector<8x256xi1>, vector<8x256xf32>
    %169 = vector.broadcast %5 : f32 to vector<8x256xf32>
    %170 = arith.mulf %169, %168 : vector<8x256xf32>
    %171 = arith.addf %159, %170 : vector<8x256xf32>
    %172 = vector.broadcast %14 : f32 to vector<8x256xf32>
    %173 = arith.mulf %172, %168 : vector<8x256xf32>
    %174 = arith.addf %162, %173 : vector<8x256xf32>
    %175 = vector.broadcast %23 : f32 to vector<8x256xf32>
    %176 = arith.mulf %175, %168 : vector<8x256xf32>
    %177 = arith.addf %165, %176 : vector<8x256xf32>
    %c241_i32 = arith.constant 241 : i32
    %178 = tpu.dynamic_rotate %102 by %c241_i32 dim 1 : vector<8x256xf32>, i32 -> vector<8x256xf32>
    %cst_37 = arith.constant 0.000000e+00 : f32
    %179 = vector.broadcast %cst_37 : f32 to vector<8x256xf32>
    %180 = arith.select %78, %178, %179 : vector<8x256xi1>, vector<8x256xf32>
    %181 = vector.broadcast %6 : f32 to vector<8x256xf32>
    %182 = arith.mulf %181, %180 : vector<8x256xf32>
    %183 = arith.addf %171, %182 : vector<8x256xf32>
    %184 = vector.broadcast %15 : f32 to vector<8x256xf32>
    %185 = arith.mulf %184, %180 : vector<8x256xf32>
    %186 = arith.addf %174, %185 : vector<8x256xf32>
    %187 = vector.broadcast %24 : f32 to vector<8x256xf32>
    %188 = arith.mulf %187, %180 : vector<8x256xf32>
    %189 = arith.addf %177, %188 : vector<8x256xf32>
    %c240_i32_38 = arith.constant 240 : i32
    %190 = tpu.dynamic_rotate %102 by %c240_i32_38 dim 1 : vector<8x256xf32>, i32 -> vector<8x256xf32>
    %cst_39 = arith.constant 0.000000e+00 : f32
    %191 = vector.broadcast %cst_39 : f32 to vector<8x256xf32>
    %192 = arith.select %80, %190, %191 : vector<8x256xi1>, vector<8x256xf32>
    %193 = vector.broadcast %7 : f32 to vector<8x256xf32>
    %194 = arith.mulf %193, %192 : vector<8x256xf32>
    %195 = arith.addf %183, %194 : vector<8x256xf32>
    %196 = vector.broadcast %16 : f32 to vector<8x256xf32>
    %197 = arith.mulf %196, %192 : vector<8x256xf32>
    %198 = arith.addf %186, %197 : vector<8x256xf32>
    %199 = vector.broadcast %25 : f32 to vector<8x256xf32>
    %200 = arith.mulf %199, %192 : vector<8x256xf32>
    %201 = arith.addf %189, %200 : vector<8x256xf32>
    %c239_i32 = arith.constant 239 : i32
    %202 = tpu.dynamic_rotate %102 by %c239_i32 dim 1 : vector<8x256xf32>, i32 -> vector<8x256xf32>
    %cst_40 = arith.constant 0.000000e+00 : f32
    %203 = vector.broadcast %cst_40 : f32 to vector<8x256xf32>
    %204 = arith.select %85, %202, %203 : vector<8x256xi1>, vector<8x256xf32>
    %205 = vector.broadcast %8 : f32 to vector<8x256xf32>
    %206 = arith.mulf %205, %204 : vector<8x256xf32>
    %207 = arith.addf %195, %206 : vector<8x256xf32>
    %208 = vector.broadcast %17 : f32 to vector<8x256xf32>
    %209 = arith.mulf %208, %204 : vector<8x256xf32>
    %210 = arith.addf %198, %209 : vector<8x256xf32>
    %211 = vector.broadcast %26 : f32 to vector<8x256xf32>
    %212 = arith.mulf %211, %204 : vector<8x256xf32>
    %213 = arith.addf %201, %212 : vector<8x256xf32>
    %c17_i32_41 = arith.constant 17 : i32
    %214 = tpu.dynamic_rotate %105 by %c17_i32_41 dim 1 : vector<8x256xf32>, i32 -> vector<8x256xf32>
    %cst_42 = arith.constant 0.000000e+00 : f32
    %215 = vector.broadcast %cst_42 : f32 to vector<8x256xf32>
    %216 = arith.select %62, %214, %215 : vector<8x256xi1>, vector<8x256xf32>
    %217 = vector.broadcast %27 : f32 to vector<8x256xf32>
    %218 = arith.mulf %217, %216 : vector<8x256xf32>
    %219 = arith.addf %207, %218 : vector<8x256xf32>
    %220 = vector.broadcast %36 : f32 to vector<8x256xf32>
    %221 = arith.mulf %220, %216 : vector<8x256xf32>
    %222 = arith.addf %210, %221 : vector<8x256xf32>
    %223 = vector.broadcast %45 : f32 to vector<8x256xf32>
    %224 = arith.mulf %223, %216 : vector<8x256xf32>
    %225 = arith.addf %213, %224 : vector<8x256xf32>
    %c16_i32_43 = arith.constant 16 : i32
    %226 = tpu.dynamic_rotate %105 by %c16_i32_43 dim 1 : vector<8x256xf32>, i32 -> vector<8x256xf32>
    %cst_44 = arith.constant 0.000000e+00 : f32
    %227 = vector.broadcast %cst_44 : f32 to vector<8x256xf32>
    %228 = arith.select %64, %226, %227 : vector<8x256xi1>, vector<8x256xf32>
    %229 = vector.broadcast %28 : f32 to vector<8x256xf32>
    %230 = arith.mulf %229, %228 : vector<8x256xf32>
    %231 = arith.addf %219, %230 : vector<8x256xf32>
    %232 = vector.broadcast %37 : f32 to vector<8x256xf32>
    %233 = arith.mulf %232, %228 : vector<8x256xf32>
    %234 = arith.addf %222, %233 : vector<8x256xf32>
    %235 = vector.broadcast %46 : f32 to vector<8x256xf32>
    %236 = arith.mulf %235, %228 : vector<8x256xf32>
    %237 = arith.addf %225, %236 : vector<8x256xf32>
    %c15_i32_45 = arith.constant 15 : i32
    %238 = tpu.dynamic_rotate %105 by %c15_i32_45 dim 1 : vector<8x256xf32>, i32 -> vector<8x256xf32>
    %cst_46 = arith.constant 0.000000e+00 : f32
    %239 = vector.broadcast %cst_46 : f32 to vector<8x256xf32>
    %240 = arith.select %69, %238, %239 : vector<8x256xi1>, vector<8x256xf32>
    %241 = vector.broadcast %29 : f32 to vector<8x256xf32>
    %242 = arith.mulf %241, %240 : vector<8x256xf32>
    %243 = arith.addf %231, %242 : vector<8x256xf32>
    %244 = vector.broadcast %38 : f32 to vector<8x256xf32>
    %245 = arith.mulf %244, %240 : vector<8x256xf32>
    %246 = arith.addf %234, %245 : vector<8x256xf32>
    %247 = vector.broadcast %47 : f32 to vector<8x256xf32>
    %248 = arith.mulf %247, %240 : vector<8x256xf32>
    %249 = arith.addf %237, %248 : vector<8x256xf32>
    %c1_i32_47 = arith.constant 1 : i32
    %250 = tpu.dynamic_rotate %105 by %c1_i32_47 dim 1 : vector<8x256xf32>, i32 -> vector<8x256xf32>
    %cst_48 = arith.constant 0.000000e+00 : f32
    %251 = vector.broadcast %cst_48 : f32 to vector<8x256xf32>
    %252 = arith.select %71, %250, %251 : vector<8x256xi1>, vector<8x256xf32>
    %253 = vector.broadcast %30 : f32 to vector<8x256xf32>
    %254 = arith.mulf %253, %252 : vector<8x256xf32>
    %255 = arith.addf %243, %254 : vector<8x256xf32>
    %256 = vector.broadcast %39 : f32 to vector<8x256xf32>
    %257 = arith.mulf %256, %252 : vector<8x256xf32>
    %258 = arith.addf %246, %257 : vector<8x256xf32>
    %259 = vector.broadcast %48 : f32 to vector<8x256xf32>
    %260 = arith.mulf %259, %252 : vector<8x256xf32>
    %261 = arith.addf %249, %260 : vector<8x256xf32>
    %262 = vector.broadcast %31 : f32 to vector<8x256xf32>
    %263 = arith.mulf %262, %105 : vector<8x256xf32>
    %264 = arith.addf %255, %263 : vector<8x256xf32>
    %265 = vector.broadcast %40 : f32 to vector<8x256xf32>
    %266 = arith.mulf %265, %105 : vector<8x256xf32>
    %267 = arith.addf %258, %266 : vector<8x256xf32>
    %268 = vector.broadcast %49 : f32 to vector<8x256xf32>
    %269 = arith.mulf %268, %105 : vector<8x256xf32>
    %270 = arith.addf %261, %269 : vector<8x256xf32>
    %c255_i32_49 = arith.constant 255 : i32
    %271 = tpu.dynamic_rotate %105 by %c255_i32_49 dim 1 : vector<8x256xf32>, i32 -> vector<8x256xf32>
    %cst_50 = arith.constant 0.000000e+00 : f32
    %272 = vector.broadcast %cst_50 : f32 to vector<8x256xf32>
    %273 = arith.select %73, %271, %272 : vector<8x256xi1>, vector<8x256xf32>
    %274 = vector.broadcast %32 : f32 to vector<8x256xf32>
    %275 = arith.mulf %274, %273 : vector<8x256xf32>
    %276 = arith.addf %264, %275 : vector<8x256xf32>
    %277 = vector.broadcast %41 : f32 to vector<8x256xf32>
    %278 = arith.mulf %277, %273 : vector<8x256xf32>
    %279 = arith.addf %267, %278 : vector<8x256xf32>
    %280 = vector.broadcast %50 : f32 to vector<8x256xf32>
    %281 = arith.mulf %280, %273 : vector<8x256xf32>
    %282 = arith.addf %270, %281 : vector<8x256xf32>
    %c241_i32_51 = arith.constant 241 : i32
    %283 = tpu.dynamic_rotate %105 by %c241_i32_51 dim 1 : vector<8x256xf32>, i32 -> vector<8x256xf32>
    %cst_52 = arith.constant 0.000000e+00 : f32
    %284 = vector.broadcast %cst_52 : f32 to vector<8x256xf32>
    %285 = arith.select %78, %283, %284 : vector<8x256xi1>, vector<8x256xf32>
    %286 = vector.broadcast %33 : f32 to vector<8x256xf32>
    %287 = arith.mulf %286, %285 : vector<8x256xf32>
    %288 = arith.addf %276, %287 : vector<8x256xf32>
    %289 = vector.broadcast %42 : f32 to vector<8x256xf32>
    %290 = arith.mulf %289, %285 : vector<8x256xf32>
    %291 = arith.addf %279, %290 : vector<8x256xf32>
    %292 = vector.broadcast %51 : f32 to vector<8x256xf32>
    %293 = arith.mulf %292, %285 : vector<8x256xf32>
    %294 = arith.addf %282, %293 : vector<8x256xf32>
    %c240_i32_53 = arith.constant 240 : i32
    %295 = tpu.dynamic_rotate %105 by %c240_i32_53 dim 1 : vector<8x256xf32>, i32 -> vector<8x256xf32>
    %cst_54 = arith.constant 0.000000e+00 : f32
    %296 = vector.broadcast %cst_54 : f32 to vector<8x256xf32>
    %297 = arith.select %80, %295, %296 : vector<8x256xi1>, vector<8x256xf32>
    %298 = vector.broadcast %34 : f32 to vector<8x256xf32>
    %299 = arith.mulf %298, %297 : vector<8x256xf32>
    %300 = arith.addf %288, %299 : vector<8x256xf32>
    %301 = vector.broadcast %43 : f32 to vector<8x256xf32>
    %302 = arith.mulf %301, %297 : vector<8x256xf32>
    %303 = arith.addf %291, %302 : vector<8x256xf32>
    %304 = vector.broadcast %52 : f32 to vector<8x256xf32>
    %305 = arith.mulf %304, %297 : vector<8x256xf32>
    %306 = arith.addf %294, %305 : vector<8x256xf32>
    %c239_i32_55 = arith.constant 239 : i32
    %307 = tpu.dynamic_rotate %105 by %c239_i32_55 dim 1 : vector<8x256xf32>, i32 -> vector<8x256xf32>
    %cst_56 = arith.constant 0.000000e+00 : f32
    %308 = vector.broadcast %cst_56 : f32 to vector<8x256xf32>
    %309 = arith.select %85, %307, %308 : vector<8x256xi1>, vector<8x256xf32>
    %310 = vector.broadcast %35 : f32 to vector<8x256xf32>
    %311 = arith.mulf %310, %309 : vector<8x256xf32>
    %312 = arith.addf %300, %311 : vector<8x256xf32>
    %313 = vector.broadcast %44 : f32 to vector<8x256xf32>
    %314 = arith.mulf %313, %309 : vector<8x256xf32>
    %315 = arith.addf %303, %314 : vector<8x256xf32>
    %316 = vector.broadcast %53 : f32 to vector<8x256xf32>
    %317 = arith.mulf %316, %309 : vector<8x256xf32>
    %318 = arith.addf %306, %317 : vector<8x256xf32>
    %c7_i32_57 = arith.constant 7 : i32
    %319 = tpu.dynamic_rotate %318 by %c7_i32_57 dim 0 : vector<8x256xf32>, i32 -> vector<8x256xf32>
    %cst_58 = arith.constant 0.000000e+00 : f32
    %320 = vector.broadcast %cst_58 : f32 to vector<8x256xf32>
    %321 = arith.select %87, %319, %320 : vector<8x256xi1>, vector<8x256xf32>
    %322 = arith.addf %315, %321 : vector<8x256xf32>
    %c1_i32_59 = arith.constant 1 : i32
    %323 = tpu.dynamic_rotate %312 by %c1_i32_59 dim 0 : vector<8x256xf32>, i32 -> vector<8x256xf32>
    %cst_60 = arith.constant 0.000000e+00 : f32
    %324 = vector.broadcast %cst_60 : f32 to vector<8x256xf32>
    %325 = arith.select %89, %323, %324 : vector<8x256xi1>, vector<8x256xf32>
    %326 = arith.addf %322, %325 : vector<8x256xf32>
    %327 = vector.shape_cast %326 : vector<8x256xf32> to vector<1x8x256xf32>
    %cst_61 = arith.constant dense<0.000000e+00> : vector<1xf32>
    %328 = vector.multi_reduction <add>, %327, %cst_61 [1, 2] : vector<1x8x256xf32> to vector<1xf32>
    %329 = vector.shape_cast %328 : vector<1xf32> to vector<1x1x1xf32>
    %330 = vector.extract %329[0, 0, 0] : f32 from vector<1x1x1xf32>
    %cst_62 = arith.constant 0.000000e+00 : f32
    %331 = arith.addf %cst_62, %330 : f32
    %332 = arith.mulf %326, %326 : vector<8x256xf32>
    %333 = vector.shape_cast %332 : vector<8x256xf32> to vector<1x8x256xf32>
    %cst_63 = arith.constant dense<0.000000e+00> : vector<1xf32>
    %334 = vector.multi_reduction <add>, %333, %cst_63 [1, 2] : vector<1x8x256xf32> to vector<1xf32>
    %335 = vector.shape_cast %334 : vector<1xf32> to vector<1x1x1xf32>
    %336 = vector.extract %335[0, 0, 0] : f32 from vector<1x1x1xf32>
    %cst_64 = arith.constant 0.000000e+00 : f32
    %337 = arith.addf %cst_64, %336 : f32
    %c1_65 = arith.constant 1 : index
    %c0_66 = arith.constant 0 : index
    %c0_67 = arith.constant 0 : index
    %c0_68 = arith.constant 0 : index
    %338 = vector.load %arg1[%c1_65, %c0_66, %c0_67, %c0_68] : memref<2x4x8x256xf32, #tpu.memory_space<vmem>>, vector<1x1x8x256xf32>
    %339 = vector.shape_cast %338 : vector<1x1x8x256xf32> to vector<8x256xf32>
    %c1_69 = arith.constant 1 : index
    %c1_70 = arith.constant 1 : index
    %c0_71 = arith.constant 0 : index
    %c0_72 = arith.constant 0 : index
    %340 = vector.load %arg1[%c1_69, %c1_70, %c0_71, %c0_72] : memref<2x4x8x256xf32, #tpu.memory_space<vmem>>, vector<1x1x8x256xf32>
    %341 = vector.shape_cast %340 : vector<1x1x8x256xf32> to vector<8x256xf32>
    %342 = arith.maximumf %339, %341 : vector<8x256xf32>
    %343 = arith.addf %339, %341 : vector<8x256xf32>
    %c1_73 = arith.constant 1 : index
    %c2_74 = arith.constant 2 : index
    %c0_75 = arith.constant 0 : index
    %c0_76 = arith.constant 0 : index
    %344 = vector.load %arg1[%c1_73, %c2_74, %c0_75, %c0_76] : memref<2x4x8x256xf32, #tpu.memory_space<vmem>>, vector<1x1x8x256xf32>
    %345 = vector.shape_cast %344 : vector<1x1x8x256xf32> to vector<8x256xf32>
    %346 = arith.maximumf %342, %345 : vector<8x256xf32>
    %347 = arith.addf %343, %345 : vector<8x256xf32>
    %c1_77 = arith.constant 1 : index
    %c3_78 = arith.constant 3 : index
    %c0_79 = arith.constant 0 : index
    %c0_80 = arith.constant 0 : index
    %348 = vector.load %arg1[%c1_77, %c3_78, %c0_79, %c0_80] : memref<2x4x8x256xf32, #tpu.memory_space<vmem>>, vector<1x1x8x256xf32>
    %349 = vector.shape_cast %348 : vector<1x1x8x256xf32> to vector<8x256xf32>
    %350 = arith.maximumf %346, %349 : vector<8x256xf32>
    %351 = arith.addf %347, %349 : vector<8x256xf32>
    %cst_81 = arith.constant 2.500000e-01 : f32
    %352 = vector.broadcast %cst_81 : f32 to vector<8x256xf32>
    %353 = arith.mulf %351, %352 : vector<8x256xf32>
    %cst_82 = arith.constant 0.000000e+00 : f32
    %354 = vector.broadcast %cst_82 : f32 to vector<8x256xf32>
    %cst_83 = arith.constant 0.000000e+00 : f32
    %355 = vector.broadcast %cst_83 : f32 to vector<8x256xf32>
    %cst_84 = arith.constant 0.000000e+00 : f32
    %356 = vector.broadcast %cst_84 : f32 to vector<8x256xf32>
    %c17_i32_85 = arith.constant 17 : i32
    %357 = tpu.dynamic_rotate %350 by %c17_i32_85 dim 1 : vector<8x256xf32>, i32 -> vector<8x256xf32>
    %cst_86 = arith.constant 0.000000e+00 : f32
    %358 = vector.broadcast %cst_86 : f32 to vector<8x256xf32>
    %359 = arith.select %62, %357, %358 : vector<8x256xi1>, vector<8x256xf32>
    %360 = vector.broadcast %0 : f32 to vector<8x256xf32>
    %361 = arith.mulf %360, %359 : vector<8x256xf32>
    %362 = arith.addf %354, %361 : vector<8x256xf32>
    %363 = vector.broadcast %9 : f32 to vector<8x256xf32>
    %364 = arith.mulf %363, %359 : vector<8x256xf32>
    %365 = arith.addf %355, %364 : vector<8x256xf32>
    %366 = vector.broadcast %18 : f32 to vector<8x256xf32>
    %367 = arith.mulf %366, %359 : vector<8x256xf32>
    %368 = arith.addf %356, %367 : vector<8x256xf32>
    %c16_i32_87 = arith.constant 16 : i32
    %369 = tpu.dynamic_rotate %350 by %c16_i32_87 dim 1 : vector<8x256xf32>, i32 -> vector<8x256xf32>
    %cst_88 = arith.constant 0.000000e+00 : f32
    %370 = vector.broadcast %cst_88 : f32 to vector<8x256xf32>
    %371 = arith.select %64, %369, %370 : vector<8x256xi1>, vector<8x256xf32>
    %372 = vector.broadcast %1 : f32 to vector<8x256xf32>
    %373 = arith.mulf %372, %371 : vector<8x256xf32>
    %374 = arith.addf %362, %373 : vector<8x256xf32>
    %375 = vector.broadcast %10 : f32 to vector<8x256xf32>
    %376 = arith.mulf %375, %371 : vector<8x256xf32>
    %377 = arith.addf %365, %376 : vector<8x256xf32>
    %378 = vector.broadcast %19 : f32 to vector<8x256xf32>
    %379 = arith.mulf %378, %371 : vector<8x256xf32>
    %380 = arith.addf %368, %379 : vector<8x256xf32>
    %c15_i32_89 = arith.constant 15 : i32
    %381 = tpu.dynamic_rotate %350 by %c15_i32_89 dim 1 : vector<8x256xf32>, i32 -> vector<8x256xf32>
    %cst_90 = arith.constant 0.000000e+00 : f32
    %382 = vector.broadcast %cst_90 : f32 to vector<8x256xf32>
    %383 = arith.select %69, %381, %382 : vector<8x256xi1>, vector<8x256xf32>
    %384 = vector.broadcast %2 : f32 to vector<8x256xf32>
    %385 = arith.mulf %384, %383 : vector<8x256xf32>
    %386 = arith.addf %374, %385 : vector<8x256xf32>
    %387 = vector.broadcast %11 : f32 to vector<8x256xf32>
    %388 = arith.mulf %387, %383 : vector<8x256xf32>
    %389 = arith.addf %377, %388 : vector<8x256xf32>
    %390 = vector.broadcast %20 : f32 to vector<8x256xf32>
    %391 = arith.mulf %390, %383 : vector<8x256xf32>
    %392 = arith.addf %380, %391 : vector<8x256xf32>
    %c1_i32_91 = arith.constant 1 : i32
    %393 = tpu.dynamic_rotate %350 by %c1_i32_91 dim 1 : vector<8x256xf32>, i32 -> vector<8x256xf32>
    %cst_92 = arith.constant 0.000000e+00 : f32
    %394 = vector.broadcast %cst_92 : f32 to vector<8x256xf32>
    %395 = arith.select %71, %393, %394 : vector<8x256xi1>, vector<8x256xf32>
    %396 = vector.broadcast %3 : f32 to vector<8x256xf32>
    %397 = arith.mulf %396, %395 : vector<8x256xf32>
    %398 = arith.addf %386, %397 : vector<8x256xf32>
    %399 = vector.broadcast %12 : f32 to vector<8x256xf32>
    %400 = arith.mulf %399, %395 : vector<8x256xf32>
    %401 = arith.addf %389, %400 : vector<8x256xf32>
    %402 = vector.broadcast %21 : f32 to vector<8x256xf32>
    %403 = arith.mulf %402, %395 : vector<8x256xf32>
    %404 = arith.addf %392, %403 : vector<8x256xf32>
    %405 = vector.broadcast %4 : f32 to vector<8x256xf32>
    %406 = arith.mulf %405, %350 : vector<8x256xf32>
    %407 = arith.addf %398, %406 : vector<8x256xf32>
    %408 = vector.broadcast %13 : f32 to vector<8x256xf32>
    %409 = arith.mulf %408, %350 : vector<8x256xf32>
    %410 = arith.addf %401, %409 : vector<8x256xf32>
    %411 = vector.broadcast %22 : f32 to vector<8x256xf32>
    %412 = arith.mulf %411, %350 : vector<8x256xf32>
    %413 = arith.addf %404, %412 : vector<8x256xf32>
    %c255_i32_93 = arith.constant 255 : i32
    %414 = tpu.dynamic_rotate %350 by %c255_i32_93 dim 1 : vector<8x256xf32>, i32 -> vector<8x256xf32>
    %cst_94 = arith.constant 0.000000e+00 : f32
    %415 = vector.broadcast %cst_94 : f32 to vector<8x256xf32>
    %416 = arith.select %73, %414, %415 : vector<8x256xi1>, vector<8x256xf32>
    %417 = vector.broadcast %5 : f32 to vector<8x256xf32>
    %418 = arith.mulf %417, %416 : vector<8x256xf32>
    %419 = arith.addf %407, %418 : vector<8x256xf32>
    %420 = vector.broadcast %14 : f32 to vector<8x256xf32>
    %421 = arith.mulf %420, %416 : vector<8x256xf32>
    %422 = arith.addf %410, %421 : vector<8x256xf32>
    %423 = vector.broadcast %23 : f32 to vector<8x256xf32>
    %424 = arith.mulf %423, %416 : vector<8x256xf32>
    %425 = arith.addf %413, %424 : vector<8x256xf32>
    %c241_i32_95 = arith.constant 241 : i32
    %426 = tpu.dynamic_rotate %350 by %c241_i32_95 dim 1 : vector<8x256xf32>, i32 -> vector<8x256xf32>
    %cst_96 = arith.constant 0.000000e+00 : f32
    %427 = vector.broadcast %cst_96 : f32 to vector<8x256xf32>
    %428 = arith.select %78, %426, %427 : vector<8x256xi1>, vector<8x256xf32>
    %429 = vector.broadcast %6 : f32 to vector<8x256xf32>
    %430 = arith.mulf %429, %428 : vector<8x256xf32>
    %431 = arith.addf %419, %430 : vector<8x256xf32>
    %432 = vector.broadcast %15 : f32 to vector<8x256xf32>
    %433 = arith.mulf %432, %428 : vector<8x256xf32>
    %434 = arith.addf %422, %433 : vector<8x256xf32>
    %435 = vector.broadcast %24 : f32 to vector<8x256xf32>
    %436 = arith.mulf %435, %428 : vector<8x256xf32>
    %437 = arith.addf %425, %436 : vector<8x256xf32>
    %c240_i32_97 = arith.constant 240 : i32
    %438 = tpu.dynamic_rotate %350 by %c240_i32_97 dim 1 : vector<8x256xf32>, i32 -> vector<8x256xf32>
    %cst_98 = arith.constant 0.000000e+00 : f32
    %439 = vector.broadcast %cst_98 : f32 to vector<8x256xf32>
    %440 = arith.select %80, %438, %439 : vector<8x256xi1>, vector<8x256xf32>
    %441 = vector.broadcast %7 : f32 to vector<8x256xf32>
    %442 = arith.mulf %441, %440 : vector<8x256xf32>
    %443 = arith.addf %431, %442 : vector<8x256xf32>
    %444 = vector.broadcast %16 : f32 to vector<8x256xf32>
    %445 = arith.mulf %444, %440 : vector<8x256xf32>
    %446 = arith.addf %434, %445 : vector<8x256xf32>
    %447 = vector.broadcast %25 : f32 to vector<8x256xf32>
    %448 = arith.mulf %447, %440 : vector<8x256xf32>
    %449 = arith.addf %437, %448 : vector<8x256xf32>
    %c239_i32_99 = arith.constant 239 : i32
    %450 = tpu.dynamic_rotate %350 by %c239_i32_99 dim 1 : vector<8x256xf32>, i32 -> vector<8x256xf32>
    %cst_100 = arith.constant 0.000000e+00 : f32
    %451 = vector.broadcast %cst_100 : f32 to vector<8x256xf32>
    %452 = arith.select %85, %450, %451 : vector<8x256xi1>, vector<8x256xf32>
    %453 = vector.broadcast %8 : f32 to vector<8x256xf32>
    %454 = arith.mulf %453, %452 : vector<8x256xf32>
    %455 = arith.addf %443, %454 : vector<8x256xf32>
    %456 = vector.broadcast %17 : f32 to vector<8x256xf32>
    %457 = arith.mulf %456, %452 : vector<8x256xf32>
    %458 = arith.addf %446, %457 : vector<8x256xf32>
    %459 = vector.broadcast %26 : f32 to vector<8x256xf32>
    %460 = arith.mulf %459, %452 : vector<8x256xf32>
    %461 = arith.addf %449, %460 : vector<8x256xf32>
    %c17_i32_101 = arith.constant 17 : i32
    %462 = tpu.dynamic_rotate %353 by %c17_i32_101 dim 1 : vector<8x256xf32>, i32 -> vector<8x256xf32>
    %cst_102 = arith.constant 0.000000e+00 : f32
    %463 = vector.broadcast %cst_102 : f32 to vector<8x256xf32>
    %464 = arith.select %62, %462, %463 : vector<8x256xi1>, vector<8x256xf32>
    %465 = vector.broadcast %27 : f32 to vector<8x256xf32>
    %466 = arith.mulf %465, %464 : vector<8x256xf32>
    %467 = arith.addf %455, %466 : vector<8x256xf32>
    %468 = vector.broadcast %36 : f32 to vector<8x256xf32>
    %469 = arith.mulf %468, %464 : vector<8x256xf32>
    %470 = arith.addf %458, %469 : vector<8x256xf32>
    %471 = vector.broadcast %45 : f32 to vector<8x256xf32>
    %472 = arith.mulf %471, %464 : vector<8x256xf32>
    %473 = arith.addf %461, %472 : vector<8x256xf32>
    %c16_i32_103 = arith.constant 16 : i32
    %474 = tpu.dynamic_rotate %353 by %c16_i32_103 dim 1 : vector<8x256xf32>, i32 -> vector<8x256xf32>
    %cst_104 = arith.constant 0.000000e+00 : f32
    %475 = vector.broadcast %cst_104 : f32 to vector<8x256xf32>
    %476 = arith.select %64, %474, %475 : vector<8x256xi1>, vector<8x256xf32>
    %477 = vector.broadcast %28 : f32 to vector<8x256xf32>
    %478 = arith.mulf %477, %476 : vector<8x256xf32>
    %479 = arith.addf %467, %478 : vector<8x256xf32>
    %480 = vector.broadcast %37 : f32 to vector<8x256xf32>
    %481 = arith.mulf %480, %476 : vector<8x256xf32>
    %482 = arith.addf %470, %481 : vector<8x256xf32>
    %483 = vector.broadcast %46 : f32 to vector<8x256xf32>
    %484 = arith.mulf %483, %476 : vector<8x256xf32>
    %485 = arith.addf %473, %484 : vector<8x256xf32>
    %c15_i32_105 = arith.constant 15 : i32
    %486 = tpu.dynamic_rotate %353 by %c15_i32_105 dim 1 : vector<8x256xf32>, i32 -> vector<8x256xf32>
    %cst_106 = arith.constant 0.000000e+00 : f32
    %487 = vector.broadcast %cst_106 : f32 to vector<8x256xf32>
    %488 = arith.select %69, %486, %487 : vector<8x256xi1>, vector<8x256xf32>
    %489 = vector.broadcast %29 : f32 to vector<8x256xf32>
    %490 = arith.mulf %489, %488 : vector<8x256xf32>
    %491 = arith.addf %479, %490 : vector<8x256xf32>
    %492 = vector.broadcast %38 : f32 to vector<8x256xf32>
    %493 = arith.mulf %492, %488 : vector<8x256xf32>
    %494 = arith.addf %482, %493 : vector<8x256xf32>
    %495 = vector.broadcast %47 : f32 to vector<8x256xf32>
    %496 = arith.mulf %495, %488 : vector<8x256xf32>
    %497 = arith.addf %485, %496 : vector<8x256xf32>
    %c1_i32_107 = arith.constant 1 : i32
    %498 = tpu.dynamic_rotate %353 by %c1_i32_107 dim 1 : vector<8x256xf32>, i32 -> vector<8x256xf32>
    %cst_108 = arith.constant 0.000000e+00 : f32
    %499 = vector.broadcast %cst_108 : f32 to vector<8x256xf32>
    %500 = arith.select %71, %498, %499 : vector<8x256xi1>, vector<8x256xf32>
    %501 = vector.broadcast %30 : f32 to vector<8x256xf32>
    %502 = arith.mulf %501, %500 : vector<8x256xf32>
    %503 = arith.addf %491, %502 : vector<8x256xf32>
    %504 = vector.broadcast %39 : f32 to vector<8x256xf32>
    %505 = arith.mulf %504, %500 : vector<8x256xf32>
    %506 = arith.addf %494, %505 : vector<8x256xf32>
    %507 = vector.broadcast %48 : f32 to vector<8x256xf32>
    %508 = arith.mulf %507, %500 : vector<8x256xf32>
    %509 = arith.addf %497, %508 : vector<8x256xf32>
    %510 = vector.broadcast %31 : f32 to vector<8x256xf32>
    %511 = arith.mulf %510, %353 : vector<8x256xf32>
    %512 = arith.addf %503, %511 : vector<8x256xf32>
    %513 = vector.broadcast %40 : f32 to vector<8x256xf32>
    %514 = arith.mulf %513, %353 : vector<8x256xf32>
    %515 = arith.addf %506, %514 : vector<8x256xf32>
    %516 = vector.broadcast %49 : f32 to vector<8x256xf32>
    %517 = arith.mulf %516, %353 : vector<8x256xf32>
    %518 = arith.addf %509, %517 : vector<8x256xf32>
    %c255_i32_109 = arith.constant 255 : i32
    %519 = tpu.dynamic_rotate %353 by %c255_i32_109 dim 1 : vector<8x256xf32>, i32 -> vector<8x256xf32>
    %cst_110 = arith.constant 0.000000e+00 : f32
    %520 = vector.broadcast %cst_110 : f32 to vector<8x256xf32>
    %521 = arith.select %73, %519, %520 : vector<8x256xi1>, vector<8x256xf32>
    %522 = vector.broadcast %32 : f32 to vector<8x256xf32>
    %523 = arith.mulf %522, %521 : vector<8x256xf32>
    %524 = arith.addf %512, %523 : vector<8x256xf32>
    %525 = vector.broadcast %41 : f32 to vector<8x256xf32>
    %526 = arith.mulf %525, %521 : vector<8x256xf32>
    %527 = arith.addf %515, %526 : vector<8x256xf32>
    %528 = vector.broadcast %50 : f32 to vector<8x256xf32>
    %529 = arith.mulf %528, %521 : vector<8x256xf32>
    %530 = arith.addf %518, %529 : vector<8x256xf32>
    %c241_i32_111 = arith.constant 241 : i32
    %531 = tpu.dynamic_rotate %353 by %c241_i32_111 dim 1 : vector<8x256xf32>, i32 -> vector<8x256xf32>
    %cst_112 = arith.constant 0.000000e+00 : f32
    %532 = vector.broadcast %cst_112 : f32 to vector<8x256xf32>
    %533 = arith.select %78, %531, %532 : vector<8x256xi1>, vector<8x256xf32>
    %534 = vector.broadcast %33 : f32 to vector<8x256xf32>
    %535 = arith.mulf %534, %533 : vector<8x256xf32>
    %536 = arith.addf %524, %535 : vector<8x256xf32>
    %537 = vector.broadcast %42 : f32 to vector<8x256xf32>
    %538 = arith.mulf %537, %533 : vector<8x256xf32>
    %539 = arith.addf %527, %538 : vector<8x256xf32>
    %540 = vector.broadcast %51 : f32 to vector<8x256xf32>
    %541 = arith.mulf %540, %533 : vector<8x256xf32>
    %542 = arith.addf %530, %541 : vector<8x256xf32>
    %c240_i32_113 = arith.constant 240 : i32
    %543 = tpu.dynamic_rotate %353 by %c240_i32_113 dim 1 : vector<8x256xf32>, i32 -> vector<8x256xf32>
    %cst_114 = arith.constant 0.000000e+00 : f32
    %544 = vector.broadcast %cst_114 : f32 to vector<8x256xf32>
    %545 = arith.select %80, %543, %544 : vector<8x256xi1>, vector<8x256xf32>
    %546 = vector.broadcast %34 : f32 to vector<8x256xf32>
    %547 = arith.mulf %546, %545 : vector<8x256xf32>
    %548 = arith.addf %536, %547 : vector<8x256xf32>
    %549 = vector.broadcast %43 : f32 to vector<8x256xf32>
    %550 = arith.mulf %549, %545 : vector<8x256xf32>
    %551 = arith.addf %539, %550 : vector<8x256xf32>
    %552 = vector.broadcast %52 : f32 to vector<8x256xf32>
    %553 = arith.mulf %552, %545 : vector<8x256xf32>
    %554 = arith.addf %542, %553 : vector<8x256xf32>
    %c239_i32_115 = arith.constant 239 : i32
    %555 = tpu.dynamic_rotate %353 by %c239_i32_115 dim 1 : vector<8x256xf32>, i32 -> vector<8x256xf32>
    %cst_116 = arith.constant 0.000000e+00 : f32
    %556 = vector.broadcast %cst_116 : f32 to vector<8x256xf32>
    %557 = arith.select %85, %555, %556 : vector<8x256xi1>, vector<8x256xf32>
    %558 = vector.broadcast %35 : f32 to vector<8x256xf32>
    %559 = arith.mulf %558, %557 : vector<8x256xf32>
    %560 = arith.addf %548, %559 : vector<8x256xf32>
    %561 = vector.broadcast %44 : f32 to vector<8x256xf32>
    %562 = arith.mulf %561, %557 : vector<8x256xf32>
    %563 = arith.addf %551, %562 : vector<8x256xf32>
    %564 = vector.broadcast %53 : f32 to vector<8x256xf32>
    %565 = arith.mulf %564, %557 : vector<8x256xf32>
    %566 = arith.addf %554, %565 : vector<8x256xf32>
    %c7_i32_117 = arith.constant 7 : i32
    %567 = tpu.dynamic_rotate %566 by %c7_i32_117 dim 0 : vector<8x256xf32>, i32 -> vector<8x256xf32>
    %cst_118 = arith.constant 0.000000e+00 : f32
    %568 = vector.broadcast %cst_118 : f32 to vector<8x256xf32>
    %569 = arith.select %87, %567, %568 : vector<8x256xi1>, vector<8x256xf32>
    %570 = arith.addf %563, %569 : vector<8x256xf32>
    %c1_i32_119 = arith.constant 1 : i32
    %571 = tpu.dynamic_rotate %560 by %c1_i32_119 dim 0 : vector<8x256xf32>, i32 -> vector<8x256xf32>
    %cst_120 = arith.constant 0.000000e+00 : f32
    %572 = vector.broadcast %cst_120 : f32 to vector<8x256xf32>
    %573 = arith.select %89, %571, %572 : vector<8x256xi1>, vector<8x256xf32>
    %574 = arith.addf %570, %573 : vector<8x256xf32>
    %575 = vector.shape_cast %574 : vector<8x256xf32> to vector<1x8x256xf32>
    %cst_121 = arith.constant dense<0.000000e+00> : vector<1xf32>
    %576 = vector.multi_reduction <add>, %575, %cst_121 [1, 2] : vector<1x8x256xf32> to vector<1xf32>
    %577 = vector.shape_cast %576 : vector<1xf32> to vector<1x1x1xf32>
    %578 = vector.extract %577[0, 0, 0] : f32 from vector<1x1x1xf32>
    %579 = arith.addf %331, %578 : f32
    %580 = arith.mulf %574, %574 : vector<8x256xf32>
    %581 = vector.shape_cast %580 : vector<8x256xf32> to vector<1x8x256xf32>
    %cst_122 = arith.constant dense<0.000000e+00> : vector<1xf32>
    %582 = vector.multi_reduction <add>, %581, %cst_122 [1, 2] : vector<1x8x256xf32> to vector<1xf32>
    %583 = vector.shape_cast %582 : vector<1xf32> to vector<1x1x1xf32>
    %584 = vector.extract %583[0, 0, 0] : f32 from vector<1x1x1xf32>
    %585 = arith.addf %337, %584 : f32
    %cst_123 = arith.constant 4.096000e+03 : f32
    %586 = arith.divf %579, %cst_123 : f32
    %cst_124 = arith.constant 4.096000e+03 : f32
    %587 = arith.divf %585, %cst_124 : f32
    %588 = arith.mulf %586, %586 : f32
    %589 = arith.subf %587, %588 : f32
    %cst_125 = arith.constant 9.99999974E-6 : f32
    %590 = arith.addf %589, %cst_125 : f32
    %591 = math.rsqrt %590 : f32
    %592 = vector.broadcast %586 : f32 to vector<8x256xf32>
    %593 = arith.subf %326, %592 : vector<8x256xf32>
    %594 = vector.broadcast %591 : f32 to vector<8x256xf32>
    %595 = arith.mulf %593, %594 : vector<8x256xf32>
    %596 = arith.negf %595 : vector<8x256xf32>
    %597 = math.exp %596 : vector<8x256xf32>
    %cst_126 = arith.constant 1.000000e+00 : f32
    %598 = vector.broadcast %cst_126 : f32 to vector<8x256xf32>
    %599 = arith.addf %598, %597 : vector<8x256xf32>
    %600 = arith.divf %598, %599 : vector<8x256xf32>
    %c0_127 = arith.constant 0 : index
    %c0_128 = arith.constant 0 : index
    %c0_129 = arith.constant 0 : index
    %c0_130 = arith.constant 0 : index
    %601 = vector.load %arg1[%c0_127, %c0_128, %c0_129, %c0_130] : memref<2x4x8x256xf32, #tpu.memory_space<vmem>>, vector<1x1x8x256xf32>
    %602 = vector.shape_cast %601 : vector<1x1x8x256xf32> to vector<8x256xf32>
    %603 = arith.mulf %602, %600 : vector<8x256xf32>
    %c0_131 = arith.constant 0 : index
    %c0_132 = arith.constant 0 : index
    %c0_133 = arith.constant 0 : index
    %c0_134 = arith.constant 0 : index
    %604 = vector.load %arg3[%c0_131, %c0_132, %c0_133, %c0_134] : memref<2x4x8x256xf32, #tpu.memory_space<vmem>>, vector<1x1x8x256xf32>
    %605 = vector.shape_cast %604 : vector<1x1x8x256xf32> to vector<8x256xf32>
    %606 = vector.shape_cast %603 : vector<8x256xf32> to vector<1x1x8x256xf32>
    tpu.vector_store %arg3[%c0_131, %c0_132, %c0_133, %c0_134], %606 {strides = array<i32>} : memref<2x4x8x256xf32, #tpu.memory_space<vmem>>, vector<1x1x8x256xf32>,
    %c0_135 = arith.constant 0 : index
    %c1_136 = arith.constant 1 : index
    %c0_137 = arith.constant 0 : index
    %c0_138 = arith.constant 0 : index
    %607 = vector.load %arg1[%c0_135, %c1_136, %c0_137, %c0_138] : memref<2x4x8x256xf32, #tpu.memory_space<vmem>>, vector<1x1x8x256xf32>
    %608 = vector.shape_cast %607 : vector<1x1x8x256xf32> to vector<8x256xf32>
    %609 = arith.mulf %608, %600 : vector<8x256xf32>
    %c0_139 = arith.constant 0 : index
    %c1_140 = arith.constant 1 : index
    %c0_141 = arith.constant 0 : index
    %c0_142 = arith.constant 0 : index
    %610 = vector.load %arg3[%c0_139, %c1_140, %c0_141, %c0_142] : memref<2x4x8x256xf32, #tpu.memory_space<vmem>>, vector<1x1x8x256xf32>
    %611 = vector.shape_cast %610 : vector<1x1x8x256xf32> to vector<8x256xf32>
    %612 = vector.shape_cast %609 : vector<8x256xf32> to vector<1x1x8x256xf32>
    tpu.vector_store %arg3[%c0_139, %c1_140, %c0_141, %c0_142], %612 {strides = array<i32>} : memref<2x4x8x256xf32, #tpu.memory_space<vmem>>, vector<1x1x8x256xf32>,
    %c0_143 = arith.constant 0 : index
    %c2_144 = arith.constant 2 : index
    %c0_145 = arith.constant 0 : index
    %c0_146 = arith.constant 0 : index
    %613 = vector.load %arg1[%c0_143, %c2_144, %c0_145, %c0_146] : memref<2x4x8x256xf32, #tpu.memory_space<vmem>>, vector<1x1x8x256xf32>
    %614 = vector.shape_cast %613 : vector<1x1x8x256xf32> to vector<8x256xf32>
    %615 = arith.mulf %614, %600 : vector<8x256xf32>
    %c0_147 = arith.constant 0 : index
    %c2_148 = arith.constant 2 : index
    %c0_149 = arith.constant 0 : index
    %c0_150 = arith.constant 0 : index
    %616 = vector.load %arg3[%c0_147, %c2_148, %c0_149, %c0_150] : memref<2x4x8x256xf32, #tpu.memory_space<vmem>>, vector<1x1x8x256xf32>
    %617 = vector.shape_cast %616 : vector<1x1x8x256xf32> to vector<8x256xf32>
    %618 = vector.shape_cast %615 : vector<8x256xf32> to vector<1x1x8x256xf32>
    tpu.vector_store %arg3[%c0_147, %c2_148, %c0_149, %c0_150], %618 {strides = array<i32>} : memref<2x4x8x256xf32, #tpu.memory_space<vmem>>, vector<1x1x8x256xf32>,
    %c0_151 = arith.constant 0 : index
    %c3_152 = arith.constant 3 : index
    %c0_153 = arith.constant 0 : index
    %c0_154 = arith.constant 0 : index
    %619 = vector.load %arg1[%c0_151, %c3_152, %c0_153, %c0_154] : memref<2x4x8x256xf32, #tpu.memory_space<vmem>>, vector<1x1x8x256xf32>
    %620 = vector.shape_cast %619 : vector<1x1x8x256xf32> to vector<8x256xf32>
    %621 = arith.mulf %620, %600 : vector<8x256xf32>
    %c0_155 = arith.constant 0 : index
    %c3_156 = arith.constant 3 : index
    %c0_157 = arith.constant 0 : index
    %c0_158 = arith.constant 0 : index
    %622 = vector.load %arg3[%c0_155, %c3_156, %c0_157, %c0_158] : memref<2x4x8x256xf32, #tpu.memory_space<vmem>>, vector<1x1x8x256xf32>
    %623 = vector.shape_cast %622 : vector<1x1x8x256xf32> to vector<8x256xf32>
    %624 = vector.shape_cast %621 : vector<8x256xf32> to vector<1x1x8x256xf32>
    tpu.vector_store %arg3[%c0_155, %c3_156, %c0_157, %c0_158], %624 {strides = array<i32>} : memref<2x4x8x256xf32, #tpu.memory_space<vmem>>, vector<1x1x8x256xf32>,
    %625 = vector.broadcast %586 : f32 to vector<8x256xf32>
    %626 = arith.subf %574, %625 : vector<8x256xf32>
    %627 = vector.broadcast %591 : f32 to vector<8x256xf32>
    %628 = arith.mulf %626, %627 : vector<8x256xf32>
    %629 = arith.negf %628 : vector<8x256xf32>
    %630 = math.exp %629 : vector<8x256xf32>
    %cst_159 = arith.constant 1.000000e+00 : f32
    %631 = vector.broadcast %cst_159 : f32 to vector<8x256xf32>
    %632 = arith.addf %631, %630 : vector<8x256xf32>
    %633 = arith.divf %631, %632 : vector<8x256xf32>
    %c1_160 = arith.constant 1 : index
    %c0_161 = arith.constant 0 : index
    %c0_162 = arith.constant 0 : index
    %c0_163 = arith.constant 0 : index
    %634 = vector.load %arg1[%c1_160, %c0_161, %c0_162, %c0_163] : memref<2x4x8x256xf32, #tpu.memory_space<vmem>>, vector<1x1x8x256xf32>
    %635 = vector.shape_cast %634 : vector<1x1x8x256xf32> to vector<8x256xf32>
    %636 = arith.mulf %635, %633 : vector<8x256xf32>
    %c1_164 = arith.constant 1 : index
    %c0_165 = arith.constant 0 : index
    %c0_166 = arith.constant 0 : index
    %c0_167 = arith.constant 0 : index
    %637 = vector.load %arg3[%c1_164, %c0_165, %c0_166, %c0_167] : memref<2x4x8x256xf32, #tpu.memory_space<vmem>>, vector<1x1x8x256xf32>
    %638 = vector.shape_cast %637 : vector<1x1x8x256xf32> to vector<8x256xf32>
    %639 = vector.shape_cast %636 : vector<8x256xf32> to vector<1x1x8x256xf32>
    tpu.vector_store %arg3[%c1_164, %c0_165, %c0_166, %c0_167], %639 {strides = array<i32>} : memref<2x4x8x256xf32, #tpu.memory_space<vmem>>, vector<1x1x8x256xf32>,
    %c1_168 = arith.constant 1 : index
    %c1_169 = arith.constant 1 : index
    %c0_170 = arith.constant 0 : index
    %c0_171 = arith.constant 0 : index
    %640 = vector.load %arg1[%c1_168, %c1_169, %c0_170, %c0_171] : memref<2x4x8x256xf32, #tpu.memory_space<vmem>>, vector<1x1x8x256xf32>
    %641 = vector.shape_cast %640 : vector<1x1x8x256xf32> to vector<8x256xf32>
    %642 = arith.mulf %641, %633 : vector<8x256xf32>
    %c1_172 = arith.constant 1 : index
    %c1_173 = arith.constant 1 : index
    %c0_174 = arith.constant 0 : index
    %c0_175 = arith.constant 0 : index
    %643 = vector.load %arg3[%c1_172, %c1_173, %c0_174, %c0_175] : memref<2x4x8x256xf32, #tpu.memory_space<vmem>>, vector<1x1x8x256xf32>
    %644 = vector.shape_cast %643 : vector<1x1x8x256xf32> to vector<8x256xf32>
    %645 = vector.shape_cast %642 : vector<8x256xf32> to vector<1x1x8x256xf32>
    tpu.vector_store %arg3[%c1_172, %c1_173, %c0_174, %c0_175], %645 {strides = array<i32>} : memref<2x4x8x256xf32, #tpu.memory_space<vmem>>, vector<1x1x8x256xf32>,
    %c1_176 = arith.constant 1 : index
    %c2_177 = arith.constant 2 : index
    %c0_178 = arith.constant 0 : index
    %c0_179 = arith.constant 0 : index
    %646 = vector.load %arg1[%c1_176, %c2_177, %c0_178, %c0_179] : memref<2x4x8x256xf32, #tpu.memory_space<vmem>>, vector<1x1x8x256xf32>
    %647 = vector.shape_cast %646 : vector<1x1x8x256xf32> to vector<8x256xf32>
    %648 = arith.mulf %647, %633 : vector<8x256xf32>
    %c1_180 = arith.constant 1 : index
    %c2_181 = arith.constant 2 : index
    %c0_182 = arith.constant 0 : index
    %c0_183 = arith.constant 0 : index
    %649 = vector.load %arg3[%c1_180, %c2_181, %c0_182, %c0_183] : memref<2x4x8x256xf32, #tpu.memory_space<vmem>>, vector<1x1x8x256xf32>
    %650 = vector.shape_cast %649 : vector<1x1x8x256xf32> to vector<8x256xf32>
    %651 = vector.shape_cast %648 : vector<8x256xf32> to vector<1x1x8x256xf32>
    tpu.vector_store %arg3[%c1_180, %c2_181, %c0_182, %c0_183], %651 {strides = array<i32>} : memref<2x4x8x256xf32, #tpu.memory_space<vmem>>, vector<1x1x8x256xf32>,
    %c1_184 = arith.constant 1 : index
    %c3_185 = arith.constant 3 : index
    %c0_186 = arith.constant 0 : index
    %c0_187 = arith.constant 0 : index
    %652 = vector.load %arg1[%c1_184, %c3_185, %c0_186, %c0_187] : memref<2x4x8x256xf32, #tpu.memory_space<vmem>>, vector<1x1x8x256xf32>
    %653 = vector.shape_cast %652 : vector<1x1x8x256xf32> to vector<8x256xf32>
    %654 = arith.mulf %653, %633 : vector<8x256xf32>
    %c1_188 = arith.constant 1 : index
    %c3_189 = arith.constant 3 : index
    %c0_190 = arith.constant 0 : index
    %c0_191 = arith.constant 0 : index
    %655 = vector.load %arg3[%c1_188, %c3_189, %c0_190, %c0_191] : memref<2x4x8x256xf32, #tpu.memory_space<vmem>>, vector<1x1x8x256xf32>
    %656 = vector.shape_cast %655 : vector<1x1x8x256xf32> to vector<8x256xf32>
    %657 = vector.shape_cast %654 : vector<8x256xf32> to vector<1x1x8x256xf32>
    tpu.vector_store %arg3[%c1_188, %c3_189, %c0_190, %c0_191], %657 {strides = array<i32>} : memref<2x4x8x256xf32, #tpu.memory_space<vmem>>, vector<1x1x8x256xf32>,
    return
  }
  func.func @transform_0(%arg0: i32) -> (i32, i32, i32, i32) {
    %c0_i32 = arith.constant 0 : i32
    %c0_i32_0 = arith.constant 0 : i32
    %c0_i32_1 = arith.constant 0 : i32
    %c0_i32_2 = arith.constant 0 : i32
    %c0_i32_3 = arith.constant 0 : i32
    return %c0_i32, %c0_i32_0, %c0_i32_1, %c0_i32_2 : i32, i32, i32, i32
  }
  func.func @transform_1(%arg0: i32) -> i32 {
    %c0_i32 = arith.constant 0 : i32
    %c0_i32_0 = arith.constant 0 : i32
    return %c0_i32 : i32
  }
  func.func @transform_2(%arg0: i32) -> (i32, i32, i32, i32) {
    %c0_i32 = arith.constant 0 : i32
    %c0_i32_0 = arith.constant 0 : i32
    %c0_i32_1 = arith.constant 0 : i32
    %c0_i32_2 = arith.constant 0 : i32
    %c0_i32_3 = arith.constant 0 : i32
    return %c0_i32, %c0_i32_0, %c0_i32_1, %c0_i32_2 : i32, i32, i32, i32
  }
}

</mosaic_0001>

<llo_original>
// kernel: c_forward.1
$region0: #{c_forward.1}
  #allocation0 [shape = 'u32[]', space=smem, size = 0x4, offset = 0x4, fixed_abs, tag = 'smem constant byte address 0x4 - core index']
  #allocation1 [shape = 'u32[144,128]{1,0:T(1,128)}', space=vmem, size = 0x12000, scoped, tag = 'internal scratch']
  %s0 = inlined_call_operand.vmem [shape: f32[2,4,8,256], index: 0, kind: input, shape index: {}]
  %s1 = inlined_call_operand.vmem [shape: f32[54], index: 1, kind: input, shape index: {}]
  %s2 = inlined_call_operand.vmem [shape: f32[2,4,8,256], index: 2, kind: output, shape index: {}]
  %s3 = sld [smem:[#allocation0]]
  $region22: #{c_forward.1} parent=0
    _
  %s5 = ssub.s32 1, %s3
  %s6 = scalar_select 0, %s5, %s3
  $region1: #{c_forward.1} parent=0
    #allocation2 [shape = 'u8[512]{0}', space=smem, size = 0x200, scoped, tag = 'input window, operand 1, single buffered']
    #allocation3 [shape = 's32[1]{0}', space=sflag, size = 0x4, scoped, tag = 'scoped memory for c_forward.1']
    %7 = vsyncpa [#allocation3], 0
    // Predicated region
    $region2: #{c_forward.1} parent=1 // pred_check
      _
    $region3: #{c_forward.1} parent=1 // pred_check_branch
      %9 = sbr.rel (0) target = $region5
    $region4: #{c_forward.1} parent=1 // pred_region
      _
    $region5: #{c_forward.1} parent=1 // pred_fallthru
      _
    // Predicated region
    $region6: #{c_forward.1} parent=1 // pred_check
      _
    $region7: #{c_forward.1} parent=1 // pred_check_branch
      %11 = sbr.rel (0) target = $region9
    $region8: #{c_forward.1} parent=1 // pred_region
      %s13 = ssub.s32 16, 16
      %14 = vsyncadd [#allocation3], %s13
      %s16 = sshll.u32 %s1, 4
      %s17 = int_to_ptr.vmem [resolvable:$true] %s16
      %19 = dma.vmem_to_smem %s17, 16, [#allocation2], [#allocation3]
    $region9: #{c_forward.1} parent=1 // pred_fallthru
      _
    // Predicated region
    $region10: #{c_forward.1} parent=1 // pred_check
      _
    $region11: #{c_forward.1} parent=1 // pred_check_branch
      %21 = sbr.rel (0) target = $region13
    $region12: #{c_forward.1} parent=1 // pred_region
      %22 = dma.done [#allocation3], 16
    $region13: #{c_forward.1} parent=1 // pred_fallthru
      _
    %23 = sfence
    %s24 = sld [smem:[#allocation2]]
    %s25 = sld [smem:[#allocation2 + $0x1]]
    %s26 = sld [smem:[#allocation2 + $0x2]]
    %s27 = sld [smem:[#allocation2 + $0x3]]
    %s28 = sld [smem:[#allocation2 + $0x4]]
    %s29 = sld [smem:[#allocation2 + $0x5]]
    %s30 = sld [smem:[#allocation2 + $0x6]]
    %s31 = sld [smem:[#allocation2 + $0x7]]
    %s32 = sld [smem:[#allocation2 + $0x8]]
    %s33 = sld [smem:[#allocation2 + $0x9]]
    %s34 = sld [smem:[#allocation2 + $0xa]]
    %s35 = sld [smem:[#allocation2 + $0xb]]
    %s36 = sld [smem:[#allocation2 + $0xc]]
    %s37 = sld [smem:[#allocation2 + $0xd]]
    %s38 = sld [smem:[#allocation2 + $0xe]]
    %s39 = sld [smem:[#allocation2 + $0xf]]
    %s40 = sld [smem:[#allocation2 + $0x10]]
    %s41 = sld [smem:[#allocation2 + $0x11]]
    %s42 = sld [smem:[#allocation2 + $0x12]]
    %s43 = sld [smem:[#allocation2 + $0x13]]
    %s44 = sld [smem:[#allocation2 + $0x14]]
    %s45 = sld [smem:[#allocation2 + $0x15]]
    %s46 = sld [smem:[#allocation2 + $0x16]]
    %s47 = sld [smem:[#allocation2 + $0x17]]
    %s48 = sld [smem:[#allocation2 + $0x18]]
    %s49 = sld [smem:[#allocation2 + $0x19]]
    %s50 = sld [smem:[#allocation2 + $0x1a]]
    %s51 = sld [smem:[#allocation2 + $0x1b]]
    %s52 = sld [smem:[#allocation2 + $0x1c]]
    %s53 = sld [smem:[#allocation2 + $0x1d]]
    %s54 = sld [smem:[#allocation2 + $0x1e]]
    %s55 = sld [smem:[#allocation2 + $0x1f]]
    %s56 = sld [smem:[#allocation2 + $0x20]]
    %s57 = sld [smem:[#allocation2 + $0x21]]
    %s58 = sld [smem:[#allocation2 + $0x22]]
    %s59 = sld [smem:[#allocation2 + $0x23]]
    %s60 = sld [smem:[#allocation2 + $0x24]]
    %s61 = sld [smem:[#allocation2 + $0x25]]
    %s62 = sld [smem:[#allocation2 + $0x26]]
    %s63 = sld [smem:[#allocation2 + $0x27]]
    %s64 = sld [smem:[#allocation2 + $0x28]]
    %s65 = sld [smem:[#allocation2 + $0x29]]
    %s66 = sld [smem:[#allocation2 + $0x2a]]
    %s67 = sld [smem:[#allocation2 + $0x2b]]
    %s68 = sld [smem:[#allocation2 + $0x2c]]
    %s69 = sld [smem:[#allocation2 + $0x2d]]
    %s70 = sld [smem:[#allocation2 + $0x2e]]
    %s71 = sld [smem:[#allocation2 + $0x2f]]
    %s72 = sld [smem:[#allocation2 + $0x30]]
    %s73 = sld [smem:[#allocation2 + $0x31]]
    %s74 = sld [smem:[#allocation2 + $0x32]]
    %s75 = sld [smem:[#allocation2 + $0x33]]
    %s76 = sld [smem:[#allocation2 + $0x34]]
    %s77 = sld [smem:[#allocation2 + $0x35]]
    %v78 = vlaneseq
    %v79 = vand.u32 %v78, 127
    %v80 = vadd.s32 %v79, 128
    %v81 = vand.u32 %v79, 15
    %v82 = vand.u32 %v80, 15
    %v83 = vlaneseq
    %v84 = vshrl.u32 %v83, 7
    %vm85 = vcmp.ge.s32.totalorder %v79, 16
    %vm86 = vcmp.ge.s32.totalorder %v80, 16
    %vm87 = vcmp.ge.s32.totalorder %v81, 1
    %vm88 = vcmp.ge.s32.totalorder %v82, 1
    %vm89 = vmand %vm85, %vm87
    %vm90 = vmand %vm86, %vm88
    %vm91 = vcmp.lt.s32.totalorder %v81, 15
    %vm92 = vcmp.lt.s32.totalorder %v82, 15
    %vm93 = vmand %vm85, %vm91
    %vm94 = vmand %vm86, %vm92
    %vm95 = vcmp.lt.s32.totalorder %v79, 240
    %vm96 = vcmp.lt.s32.totalorder %v80, 240
    %vm97 = vmand %vm95, %vm87
    %vm98 = vmand %vm96, %vm88
    %vm99 = vmand %vm95, %vm91
    %vm100 = vmand %vm96, %vm92
    %vm101 = vcmp.lt.s32.totalorder %v84, 7
    %vm102 = vcmp.ge.s32.totalorder %v84, 1
    %v103 = vld [vmem:[%s0] sm:$0xff]
    %v104 = vld [vmem:[%s0 + $0x8] sm:$0xff]
    %s105 = scalar_lea.vmem %s0, 16
    %v106 = vld [vmem:[%s105] sm:$0xff]
    %v107 = vld [vmem:[%s105 + $0x8] sm:$0xff]
    %v108 = vmax.f32 %v103, %v106
    %v109 = vmax.f32 %v104, %v107
    %v110 = vadd.f32 %v103, %v106
    %v111 = vadd.f32 %v104, %v107
    %s112 = scalar_lea.vmem %s0, 32
    %v113 = vld [vmem:[%s112] sm:$0xff]
    %v114 = vld [vmem:[%s112 + $0x8] sm:$0xff]
    %v115 = vmax.f32 %v108, %v113
    %v116 = vmax.f32 %v109, %v114
    %v117 = vadd.f32 %v110, %v113
    %v118 = vadd.f32 %v111, %v114
    %s119 = scalar_lea.vmem %s0, 48
    %v120 = vld [vmem:[%s119] sm:$0xff]
    %v121 = vld [vmem:[%s119 + $0x8] sm:$0xff]
    %v122 = vmax.f32 %v115, %v120
    %v123 = vmax.f32 %v116, %v121
    %v124 = vadd.f32 %v117, %v120
    %v125 = vadd.f32 %v118, %v121
    %v126 = vmul.f32 %v124, 0.25
    %v127 = vmul.f32 %v125, 0.25
    %128 = vrot.lane.b32.xlu0 %v122, 17
    %v129 = vpop.permute.xlu0 %128
    %130 = vrot.lane.b32.xlu0 %v123, 17
    %v131 = vpop.permute.xlu0 %130
    %vm132 = vcmp.lt.s32.totalorder %v79, 17
    %v133 = vsel %vm132, %v129, %v131
    %v134 = vsel %vm132, %v131, %v129
    %v135 = vsel %vm89, %v134, 0.0
    %v136 = vsel %vm90, %v133, 0.0
    %v137 = vstv %s24
    %v138 = vmul.f32 %v137, %v135
    %v139 = vmul.f32 %v137, %v136
    %v140 = vadd.f32 %v138, 0.0
    %v141 = vadd.f32 %v139, 0.0
    %v142 = vstv %s33
    %v143 = vmul.f32 %v142, %v135
    %v144 = vmul.f32 %v142, %v136
    %v145 = vadd.f32 %v143, 0.0
    %v146 = vadd.f32 %v144, 0.0
    %v147 = vstv %s42
    %v148 = vmul.f32 %v147, %v135
    %v149 = vmul.f32 %v147, %v136
    %v150 = vadd.f32 %v148, 0.0
    %v151 = vadd.f32 %v149, 0.0
    %152 = vrot.lane.b32.xlu0 %v122, 16
    %v153 = vpop.permute.xlu0 %152
    %154 = vrot.lane.b32.xlu0 %v123, 16
    %v155 = vpop.permute.xlu0 %154
    %vm156 = vcmp.lt.s32.totalorder %v79, 16
    %v157 = vsel %vm156, %v153, %v155
    %v158 = vsel %vm156, %v155, %v153
    %v159 = vsel %vm85, %v158, 0.0
    %v160 = vsel %vm86, %v157, 0.0
    %v161 = vstv %s25
    %v162 = vmul.f32 %v161, %v159
    %v163 = vmul.f32 %v161, %v160
    %v164 = vadd.f32 %v140, %v162
    %v165 = vadd.f32 %v141, %v163
    %v166 = vstv %s34
    %v167 = vmul.f32 %v166, %v159
    %v168 = vmul.f32 %v166, %v160
    %v169 = vadd.f32 %v145, %v167
    %v170 = vadd.f32 %v146, %v168
    %v171 = vstv %s43
    %v172 = vmul.f32 %v171, %v159
    %v173 = vmul.f32 %v171, %v160
    %v174 = vadd.f32 %v150, %v172
    %v175 = vadd.f32 %v151, %v173
    %176 = vrot.lane.b32.xlu0 %v122, 15
    %v177 = vpop.permute.xlu0 %176
    %178 = vrot.lane.b32.xlu0 %v123, 15
    %v179 = vpop.permute.xlu0 %178
    %vm180 = vcmp.lt.s32.totalorder %v79, 15
    %v181 = vsel %vm180, %v177, %v179
    %v182 = vsel %vm180, %v179, %v177
    %v183 = vsel %vm93, %v182, 0.0
    %v184 = vsel %vm94, %v181, 0.0
    %v185 = vstv %s26
    %v186 = vmul.f32 %v185, %v183
    %v187 = vmul.f32 %v185, %v184
    %v188 = vadd.f32 %v164, %v186
    %v189 = vadd.f32 %v165, %v187
    %v190 = vstv %s35
    %v191 = vmul.f32 %v190, %v183
    %v192 = vmul.f32 %v190, %v184
    %v193 = vadd.f32 %v169, %v191
    %v194 = vadd.f32 %v170, %v192
    %v195 = vstv %s44
    %v196 = vmul.f32 %v195, %v183
    %v197 = vmul.f32 %v195, %v184
    %v198 = vadd.f32 %v174, %v196
    %v199 = vadd.f32 %v175, %v197
    %200 = vrot.lane.b32.xlu0 %v122, 1
    %v201 = vpop.permute.xlu0 %200
    %202 = vrot.lane.b32.xlu0 %v123, 1
    %v203 = vpop.permute.xlu0 %202
    %vm204 = vcmp.lt.s32.totalorder %v79, 1
    %v205 = vsel %vm204, %v201, %v203
    %v206 = vsel %vm204, %v203, %v201
    %v207 = vsel %vm87, %v206, 0.0
    %v208 = vsel %vm88, %v205, 0.0
    %v209 = vstv %s27
    %v210 = vmul.f32 %v209, %v207
    %v211 = vmul.f32 %v209, %v208
    %v212 = vadd.f32 %v188, %v210
    %v213 = vadd.f32 %v189, %v211
    %v214 = vstv %s36
    %v215 = vmul.f32 %v214, %v207
    %v216 = vmul.f32 %v214, %v208
    %v217 = vadd.f32 %v193, %v215
    %v218 = vadd.f32 %v194, %v216
    %v219 = vstv %s45
    %v220 = vmul.f32 %v219, %v207
    %v221 = vmul.f32 %v219, %v208
    %v222 = vadd.f32 %v198, %v220
    %v223 = vadd.f32 %v199, %v221
    %v224 = vstv %s28
    %v225 = vmul.f32 %v224, %v122
    %v226 = vmul.f32 %v224, %v123
    %v227 = vadd.f32 %v212, %v225
    %v228 = vadd.f32 %v213, %v226
    %v229 = vstv %s37
    %v230 = vmul.f32 %v229, %v122
    %v231 = vmul.f32 %v229, %v123
    %v232 = vadd.f32 %v217, %v230
    %v233 = vadd.f32 %v218, %v231
    %v234 = vstv %s46
    %v235 = vmul.f32 %v234, %v122
    %v236 = vmul.f32 %v234, %v123
    %v237 = vadd.f32 %v222, %v235
    %v238 = vadd.f32 %v223, %v236
    %239 = vrot.lane.b32.xlu0 %v122, 127
    %v240 = vpop.permute.xlu0 %239
    %241 = vrot.lane.b32.xlu0 %v123, 127
    %v242 = vpop.permute.xlu0 %241
    %vm243 = vcmp.lt.s32.totalorder %v79, 127
    %v244 = vsel %vm243, %v240, %v242
    %v245 = vsel %vm243, %v242, %v240
    %v246 = vsel %vm91, %v244, 0.0
    %v247 = vsel %vm92, %v245, 0.0
    %v248 = vstv %s29
    %v249 = vmul.f32 %v248, %v246
    %v250 = vmul.f32 %v248, %v247
    %v251 = vadd.f32 %v227, %v249
    %v252 = vadd.f32 %v228, %v250
    %v253 = vstv %s38
    %v254 = vmul.f32 %v253, %v246
    %v255 = vmul.f32 %v253, %v247
    %v256 = vadd.f32 %v232, %v254
    %v257 = vadd.f32 %v233, %v255
    %v258 = vstv %s47
    %v259 = vmul.f32 %v258, %v246
    %v260 = vmul.f32 %v258, %v247
    %v261 = vadd.f32 %v237, %v259
    %v262 = vadd.f32 %v238, %v260
    %263 = vrot.lane.b32.xlu0 %v122, 113
    %v264 = vpop.permute.xlu0 %263
    %265 = vrot.lane.b32.xlu0 %v123, 113
    %v266 = vpop.permute.xlu0 %265
    %vm267 = vcmp.lt.s32.totalorder %v79, 113
    %v268 = vsel %vm267, %v264, %v266
    %v269 = vsel %vm267, %v266, %v264
    %v270 = vsel %vm97, %v268, 0.0
    %v271 = vsel %vm98, %v269, 0.0
    %v272 = vstv %s30
    %v273 = vmul.f32 %v272, %v270
    %v274 = vmul.f32 %v272, %v271
    %v275 = vadd.f32 %v251, %v273
    %v276 = vadd.f32 %v252, %v274
    %v277 = vstv %s39
    %v278 = vmul.f32 %v277, %v270
    %v279 = vmul.f32 %v277, %v271
    %v280 = vadd.f32 %v256, %v278
    %v281 = vadd.f32 %v257, %v279
    %v282 = vstv %s48
    %v283 = vmul.f32 %v282, %v270
    %v284 = vmul.f32 %v282, %v271
    %v285 = vadd.f32 %v261, %v283
    %v286 = vadd.f32 %v262, %v284
    %287 = vrot.lane.b32.xlu0 %v122, 112
    %v288 = vpop.permute.xlu0 %287
    %289 = vrot.lane.b32.xlu0 %v123, 112
    %v290 = vpop.permute.xlu0 %289
    %vm291 = vcmp.lt.s32.totalorder %v79, 112
    %v292 = vsel %vm291, %v288, %v290
    %v293 = vsel %vm291, %v290, %v288
    %v294 = vsel %vm95, %v292, 0.0
    %v295 = vsel %vm96, %v293, 0.0
    %v296 = vstv %s31
    %v297 = vmul.f32 %v296, %v294
    %v298 = vmul.f32 %v296, %v295
    %v299 = vadd.f32 %v275, %v297
    %v300 = vadd.f32 %v276, %v298
    %v301 = vstv %s40
    %v302 = vmul.f32 %v301, %v294
    %v303 = vmul.f32 %v301, %v295
    %v304 = vadd.f32 %v280, %v302
    %v305 = vadd.f32 %v281, %v303
    %v306 = vstv %s49
    %v307 = vmul.f32 %v306, %v294
    %v308 = vmul.f32 %v306, %v295
    %v309 = vadd.f32 %v285, %v307
    %v310 = vadd.f32 %v286, %v308
    %311 = vrot.lane.b32.xlu0 %v122, 111
    %v312 = vpop.permute.xlu0 %311
    %313 = vrot.lane.b32.xlu0 %v123, 111
    %v314 = vpop.permute.xlu0 %313
    %vm315 = vcmp.lt.s32.totalorder %v79, 111
    %v316 = vsel %vm315, %v312, %v314
    %v317 = vsel %vm315, %v314, %v312
    %v318 = vsel %vm99, %v316, 0.0
    %v319 = vsel %vm100, %v317, 0.0
    %v320 = vstv %s32
    %v321 = vmul.f32 %v320, %v318
    %v322 = vmul.f32 %v320, %v319
    %v323 = vadd.f32 %v299, %v321
    %v324 = vadd.f32 %v300, %v322
    %v325 = vstv %s41
    %v326 = vmul.f32 %v325, %v318
    %v327 = vmul.f32 %v325, %v319
    %v328 = vadd.f32 %v304, %v326
    %v329 = vadd.f32 %v305, %v327
    %v330 = vstv %s50
    %v331 = vmul.f32 %v330, %v318
    %v332 = vmul.f32 %v330, %v319
    %v333 = vadd.f32 %v309, %v331
    %v334 = vadd.f32 %v310, %v332
    %335 = vrot.lane.b32.xlu0 %v126, 17
    %v336 = vpop.permute.xlu0 %335
    %337 = vrot.lane.b32.xlu0 %v127, 17
    %v338 = vpop.permute.xlu0 %337
    %v339 = vsel %vm132, %v336, %v338
    %v340 = vsel %vm132, %v338, %v336
    %v341 = vsel %vm89, %v340, 0.0
    %v342 = vsel %vm90, %v339, 0.0
    %v343 = vstv %s51
    %v344 = vmul.f32 %v343, %v341
    %v345 = vmul.f32 %v343, %v342
    %v346 = vadd.f32 %v323, %v344
    %v347 = vadd.f32 %v324, %v345
    %v348 = vstv %s60
    %v349 = vmul.f32 %v348, %v341
    %v350 = vmul.f32 %v348, %v342
    %v351 = vadd.f32 %v328, %v349
    %v352 = vadd.f32 %v329, %v350
    %v353 = vstv %s69
    %v354 = vmul.f32 %v353, %v341
    %v355 = vmul.f32 %v353, %v342
    %v356 = vadd.f32 %v333, %v354
    %v357 = vadd.f32 %v334, %v355
    %358 = vrot.lane.b32.xlu0 %v126, 16
    %v359 = vpop.permute.xlu0 %358
    %360 = vrot.lane.b32.xlu0 %v127, 16
    %v361 = vpop.permute.xlu0 %360
    %v362 = vsel %vm156, %v359, %v361
    %v363 = vsel %vm156, %v361, %v359
    %v364 = vsel %vm85, %v363, 0.0
    %v365 = vsel %vm86, %v362, 0.0
    %v366 = vstv %s52
    %v367 = vmul.f32 %v366, %v364
    %v368 = vmul.f32 %v366, %v365
    %v369 = vadd.f32 %v346, %v367
    %v370 = vadd.f32 %v347, %v368
    %v371 = vstv %s61
    %v372 = vmul.f32 %v371, %v364
    %v373 = vmul.f32 %v371, %v365
    %v374 = vadd.f32 %v351, %v372
    %v375 = vadd.f32 %v352, %v373
    %v376 = vstv %s70
    %v377 = vmul.f32 %v376, %v364
    %v378 = vmul.f32 %v376, %v365
    %v379 = vadd.f32 %v356, %v377
    %v380 = vadd.f32 %v357, %v378
    %381 = vrot.lane.b32.xlu0 %v126, 15
    %v382 = vpop.permute.xlu0 %381
    %383 = vrot.lane.b32.xlu0 %v127, 15
    %v384 = vpop.permute.xlu0 %383
    %v385 = vsel %vm180, %v382, %v384
    %v386 = vsel %vm180, %v384, %v382
    %v387 = vsel %vm93, %v386, 0.0
    %v388 = vsel %vm94, %v385, 0.0
    %v389 = vstv %s53
    %v390 = vmul.f32 %v389, %v387
    %v391 = vmul.f32 %v389, %v388
    %v392 = vadd.f32 %v369, %v390
    %v393 = vadd.f32 %v370, %v391
    %v394 = vstv %s62
    %v395 = vmul.f32 %v394, %v387
    %v396 = vmul.f32 %v394, %v388
    %v397 = vadd.f32 %v374, %v395
    %v398 = vadd.f32 %v375, %v396
    %v399 = vstv %s71
    %v400 = vmul.f32 %v399, %v387
    %v401 = vmul.f32 %v399, %v388
    %v402 = vadd.f32 %v379, %v400
    %v403 = vadd.f32 %v380, %v401
    %404 = vrot.lane.b32.xlu0 %v126, 1
    %v405 = vpop.permute.xlu0 %404
    %406 = vrot.lane.b32.xlu0 %v127, 1
    %v407 = vpop.permute.xlu0 %406
    %v408 = vsel %vm204, %v405, %v407
    %v409 = vsel %vm204, %v407, %v405
    %v410 = vsel %vm87, %v409, 0.0
    %v411 = vsel %vm88, %v408, 0.0
    %v412 = vstv %s54
    %v413 = vmul.f32 %v412, %v410
    %v414 = vmul.f32 %v412, %v411
    %v415 = vadd.f32 %v392, %v413
    %v416 = vadd.f32 %v393, %v414
    %v417 = vstv %s63
    %v418 = vmul.f32 %v417, %v410
    %v419 = vmul.f32 %v417, %v411
    %v420 = vadd.f32 %v397, %v418
    %v421 = vadd.f32 %v398, %v419
    %v422 = vstv %s72
    %v423 = vmul.f32 %v422, %v410
    %v424 = vmul.f32 %v422, %v411
    %v425 = vadd.f32 %v402, %v423
    %v426 = vadd.f32 %v403, %v424
    %v427 = vstv %s55
    %v428 = vmul.f32 %v427, %v126
    %v429 = vmul.f32 %v427, %v127
    %v430 = vadd.f32 %v415, %v428
    %v431 = vadd.f32 %v416, %v429
    %v432 = vstv %s64
    %v433 = vmul.f32 %v432, %v126
    %v434 = vmul.f32 %v432, %v127
    %v435 = vadd.f32 %v420, %v433
    %v436 = vadd.f32 %v421, %v434
    %v437 = vstv %s73
    %v438 = vmul.f32 %v437, %v126
    %v439 = vmul.f32 %v437, %v127
    %v440 = vadd.f32 %v425, %v438
    %v441 = vadd.f32 %v426, %v439
    %442 = vrot.lane.b32.xlu0 %v126, 127
    %v443 = vpop.permute.xlu0 %442
    %444 = vrot.lane.b32.xlu0 %v127, 127
    %v445 = vpop.permute.xlu0 %444
    %v446 = vsel %vm243, %v443, %v445
    %v447 = vsel %vm243, %v445, %v443
    %v448 = vsel %vm91, %v446, 0.0
    %v449 = vsel %vm92, %v447, 0.0
    %v450 = vstv %s56
    %v451 = vmul.f32 %v450, %v448
    %v452 = vmul.f32 %v450, %v449
    %v453 = vadd.f32 %v430, %v451
    %v454 = vadd.f32 %v431, %v452
    %v455 = vstv %s65
    %v456 = vmul.f32 %v455, %v448
    %v457 = vmul.f32 %v455, %v449
    %v458 = vadd.f32 %v435, %v456
    %v459 = vadd.f32 %v436, %v457
    %v460 = vstv %s74
    %v461 = vmul.f32 %v460, %v448
    %v462 = vmul.f32 %v460, %v449
    %v463 = vadd.f32 %v440, %v461
    %v464 = vadd.f32 %v441, %v462
    %465 = vrot.lane.b32.xlu0 %v126, 113
    %v466 = vpop.permute.xlu0 %465
    %467 = vrot.lane.b32.xlu0 %v127, 113
    %v468 = vpop.permute.xlu0 %467
    %v469 = vsel %vm267, %v466, %v468
    %v470 = vsel %vm267, %v468, %v466
    %v471 = vsel %vm97, %v469, 0.0
    %v472 = vsel %vm98, %v470, 0.0
    %v473 = vstv %s57
    %v474 = vmul.f32 %v473, %v471
    %v475 = vmul.f32 %v473, %v472
    %v476 = vadd.f32 %v453, %v474
    %v477 = vadd.f32 %v454, %v475
    %v478 = vstv %s66
    %v479 = vmul.f32 %v478, %v471
    %v480 = vmul.f32 %v478, %v472
    %v481 = vadd.f32 %v458, %v479
    %v482 = vadd.f32 %v459, %v480
    %v483 = vstv %s75
    %v484 = vmul.f32 %v483, %v471
    %v485 = vmul.f32 %v483, %v472
    %v486 = vadd.f32 %v463, %v484
    %v487 = vadd.f32 %v464, %v485
    %488 = vrot.lane.b32.xlu0 %v126, 112
    %v489 = vpop.permute.xlu0 %488
    %490 = vrot.lane.b32.xlu0 %v127, 112
    %v491 = vpop.permute.xlu0 %490
    %v492 = vsel %vm291, %v489, %v491
    %v493 = vsel %vm291, %v491, %v489
    %v494 = vsel %vm95, %v492, 0.0
    %v495 = vsel %vm96, %v493, 0.0
    %v496 = vstv %s58
    %v497 = vmul.f32 %v496, %v494
    %v498 = vmul.f32 %v496, %v495
    %v499 = vadd.f32 %v476, %v497
    %v500 = vadd.f32 %v477, %v498
    %v501 = vstv %s67
    %v502 = vmul.f32 %v501, %v494
    %v503 = vmul.f32 %v501, %v495
    %v504 = vadd.f32 %v481, %v502
    %v505 = vadd.f32 %v482, %v503
    %v506 = vstv %s76
    %v507 = vmul.f32 %v506, %v494
    %v508 = vmul.f32 %v506, %v495
    %v509 = vadd.f32 %v486, %v507
    %v510 = vadd.f32 %v487, %v508
    %511 = vrot.lane.b32.xlu0 %v126, 111
    %v512 = vpop.permute.xlu0 %511
    %513 = vrot.lane.b32.xlu0 %v127, 111
    %v514 = vpop.permute.xlu0 %513
    %v515 = vsel %vm315, %v512, %v514
    %v516 = vsel %vm315, %v514, %v512
    %v517 = vsel %vm99, %v515, 0.0
    %v518 = vsel %vm100, %v516, 0.0
    %v519 = vstv %s59
    %v520 = vmul.f32 %v519, %v517
    %v521 = vmul.f32 %v519, %v518
    %v522 = vadd.f32 %v499, %v520
    %v523 = vadd.f32 %v500, %v521
    %v524 = vstv %s68
    %v525 = vmul.f32 %v524, %v517
    %v526 = vmul.f32 %v524, %v518
    %v527 = vadd.f32 %v504, %v525
    %v528 = vadd.f32 %v505, %v526
    %v529 = vstv %s77
    %v530 = vmul.f32 %v529, %v517
    %v531 = vmul.f32 %v529, %v518
    %v532 = vadd.f32 %v509, %v530
    %v533 = vadd.f32 %v510, %v531
    %v534 = vrot.slane %v532, 1
    %v535 = vrot.slane %v533, 1
    %v536 = vsel %vm101, %v534, 0.0
    %v537 = vsel %vm101, %v535, 0.0
    %v538 = vadd.f32 %v527, %v536
    %v539 = vadd.f32 %v528, %v537
    %v540 = vrot.slane %v522, 7
    %v541 = vrot.slane %v523, 7
    %v542 = vsel %vm102, %v540, 0.0
    %v543 = vsel %vm102, %v541, 0.0
    %v544 = vadd.f32 %v538, %v542
    %v545 = vadd.f32 %v539, %v543
    %v546 = vadd.f32 %v544, %v545
    %547 = vadd.xlane.f32.xlu0 %v546
    %v548 = vpop.xlane.xlu0 %547
    %v549 = vrot.slane %v548, 4
    %v550 = vadd.f32 %v548, %v549
    %v551 = vrot.slane %v550, 2
    %v552 = vadd.f32 %v550, %v551
    %v553 = vrot.slane %v552, 1
    %v554 = vadd.f32 %v552, %v553
    %s555 = vtos %v554
    %s556 = sadd.f32 %s555, 0.0
    %v557 = vmul.f32 %v544, %v544
    %v558 = vmul.f32 %v545, %v545
    %v559 = vadd.f32 %v557, %v558
    %560 = vadd.xlane.f32.xlu0 %v559
    %v561 = vpop.xlane.xlu0 %560
    %v562 = vrot.slane %v561, 4
    %v563 = vadd.f32 %v561, %v562
    %v564 = vrot.slane %v563, 2
    %v565 = vadd.f32 %v563, %v564
    %v566 = vrot.slane %v565, 1
    %v567 = vadd.f32 %v565, %v566
    %s568 = vtos %v567
    %s569 = sadd.f32 %s568, 0.0
    %s570 = scalar_lea.vmem %s0, 64
    %v571 = vld [vmem:[%s570] sm:$0xff]
    %v572 = vld [vmem:[%s570 + $0x8] sm:$0xff]
    %s573 = scalar_lea.vmem %s0, 80
    %v574 = vld [vmem:[%s573] sm:$0xff]
    %v575 = vld [vmem:[%s573 + $0x8] sm:$0xff]
    %v576 = vmax.f32 %v571, %v574
    %v577 = vmax.f32 %v572, %v575
    %v578 = vadd.f32 %v571, %v574
    %v579 = vadd.f32 %v572, %v575
    %s580 = scalar_lea.vmem %s0, 96
    %v581 = vld [vmem:[%s580] sm:$0xff]
    %v582 = vld [vmem:[%s580 + $0x8] sm:$0xff]
    %v583 = vmax.f32 %v576, %v581
    %v584 = vmax.f32 %v577, %v582
    %v585 = vadd.f32 %v578, %v581
    %v586 = vadd.f32 %v579, %v582
    %s587 = scalar_lea.vmem %s0, 112
    %v588 = vld [vmem:[%s587] sm:$0xff]
    %v589 = vld [vmem:[%s587 + $0x8] sm:$0xff]
    %v590 = vmax.f32 %v583, %v588
    %v591 = vmax.f32 %v584, %v589
    %v592 = vadd.f32 %v585, %v588
    %v593 = vadd.f32 %v586, %v589
    %v594 = vmul.f32 %v592, 0.25
    %v595 = vmul.f32 %v593, 0.25
    %596 = vrot.lane.b32.xlu0 %v590, 17
    %v597 = vpop.permute.xlu0 %596
    %598 = vrot.lane.b32.xlu0 %v591, 17
    %v599 = vpop.permute.xlu0 %598
    %v600 = vsel %vm132, %v597, %v599
    %v601 = vsel %vm132, %v599, %v597
    %v602 = vsel %vm89, %v601, 0.0
    %v603 = vsel %vm90, %v600, 0.0
    %v604 = vmul.f32 %v137, %v602
    %v605 = vmul.f32 %v137, %v603
    %v606 = vadd.f32 %v604, 0.0
    %v607 = vadd.f32 %v605, 0.0
    %v608 = vmul.f32 %v142, %v602
    %v609 = vmul.f32 %v142, %v603
    %v610 = vadd.f32 %v608, 0.0
    %v611 = vadd.f32 %v609, 0.0
    %v612 = vmul.f32 %v147, %v602
    %v613 = vmul.f32 %v147, %v603
    %v614 = vadd.f32 %v612, 0.0
    %v615 = vadd.f32 %v613, 0.0
    %616 = vrot.lane.b32.xlu0 %v590, 16
    %v617 = vpop.permute.xlu0 %616
    %618 = vrot.lane.b32.xlu0 %v591, 16
    %v619 = vpop.permute.xlu0 %618
    %v620 = vsel %vm156, %v617, %v619
    %v621 = vsel %vm156, %v619, %v617
    %v622 = vsel %vm85, %v621, 0.0
    %v623 = vsel %vm86, %v620, 0.0
    %v624 = vmul.f32 %v161, %v622
    %v625 = vmul.f32 %v161, %v623
    %v626 = vadd.f32 %v606, %v624
    %v627 = vadd.f32 %v607, %v625
    %v628 = vmul.f32 %v166, %v622
    %v629 = vmul.f32 %v166, %v623
    %v630 = vadd.f32 %v610, %v628
    %v631 = vadd.f32 %v611, %v629
    %v632 = vmul.f32 %v171, %v622
    %v633 = vmul.f32 %v171, %v623
    %v634 = vadd.f32 %v614, %v632
    %v635 = vadd.f32 %v615, %v633
    %636 = vrot.lane.b32.xlu0 %v590, 15
    %v637 = vpop.permute.xlu0 %636
    %638 = vrot.lane.b32.xlu0 %v591, 15
    %v639 = vpop.permute.xlu0 %638
    %v640 = vsel %vm180, %v637, %v639
    %v641 = vsel %vm180, %v639, %v637
    %v642 = vsel %vm93, %v641, 0.0
    %v643 = vsel %vm94, %v640, 0.0
    %v644 = vmul.f32 %v185, %v642
    %v645 = vmul.f32 %v185, %v643
    %v646 = vadd.f32 %v626, %v644
    %v647 = vadd.f32 %v627, %v645
    %v648 = vmul.f32 %v190, %v642
    %v649 = vmul.f32 %v190, %v643
    %v650 = vadd.f32 %v630, %v648
    %v651 = vadd.f32 %v631, %v649
    %v652 = vmul.f32 %v195, %v642
    %v653 = vmul.f32 %v195, %v643
    %v654 = vadd.f32 %v634, %v652
    %v655 = vadd.f32 %v635, %v653
    %656 = vrot.lane.b32.xlu0 %v590, 1
    %v657 = vpop.permute.xlu0 %656
    %658 = vrot.lane.b32.xlu0 %v591, 1
    %v659 = vpop.permute.xlu0 %658
    %v660 = vsel %vm204, %v657, %v659
    %v661 = vsel %vm204, %v659, %v657
    %v662 = vsel %vm87, %v661, 0.0
    %v663 = vsel %vm88, %v660, 0.0
    %v664 = vmul.f32 %v209, %v662
    %v665 = vmul.f32 %v209, %v663
    %v666 = vadd.f32 %v646, %v664
    %v667 = vadd.f32 %v647, %v665
    %v668 = vmul.f32 %v214, %v662
    %v669 = vmul.f32 %v214, %v663
    %v670 = vadd.f32 %v650, %v668
    %v671 = vadd.f32 %v651, %v669
    %v672 = vmul.f32 %v219, %v662
    %v673 = vmul.f32 %v219, %v663
    %v674 = vadd.f32 %v654, %v672
    %v675 = vadd.f32 %v655, %v673
    %v676 = vmul.f32 %v224, %v590
    %v677 = vmul.f32 %v224, %v591
    %v678 = vadd.f32 %v666, %v676
    %v679 = vadd.f32 %v667, %v677
    %v680 = vmul.f32 %v229, %v590
    %v681 = vmul.f32 %v229, %v591
    %v682 = vadd.f32 %v670, %v680
    %v683 = vadd.f32 %v671, %v681
    %v684 = vmul.f32 %v234, %v590
    %v685 = vmul.f32 %v234, %v591
    %v686 = vadd.f32 %v674, %v684
    %v687 = vadd.f32 %v675, %v685
    %688 = vrot.lane.b32.xlu0 %v590, 127
    %v689 = vpop.permute.xlu0 %688
    %690 = vrot.lane.b32.xlu0 %v591, 127
    %v691 = vpop.permute.xlu0 %690
    %v692 = vsel %vm243, %v689, %v691
    %v693 = vsel %vm243, %v691, %v689
    %v694 = vsel %vm91, %v692, 0.0
    %v695 = vsel %vm92, %v693, 0.0
    %v696 = vmul.f32 %v248, %v694
    %v697 = vmul.f32 %v248, %v695
    %v698 = vadd.f32 %v678, %v696
    %v699 = vadd.f32 %v679, %v697
    %v700 = vmul.f32 %v253, %v694
    %v701 = vmul.f32 %v253, %v695
    %v702 = vadd.f32 %v682, %v700
    %v703 = vadd.f32 %v683, %v701
    %v704 = vmul.f32 %v258, %v694
    %v705 = vmul.f32 %v258, %v695
    %v706 = vadd.f32 %v686, %v704
    %v707 = vadd.f32 %v687, %v705
    %708 = vrot.lane.b32.xlu0 %v590, 113
    %v709 = vpop.permute.xlu0 %708
    %710 = vrot.lane.b32.xlu0 %v591, 113
    %v711 = vpop.permute.xlu0 %710
    %v712 = vsel %vm267, %v709, %v711
    %v713 = vsel %vm267, %v711, %v709
    %v714 = vsel %vm97, %v712, 0.0
    %v715 = vsel %vm98, %v713, 0.0
    %v716 = vmul.f32 %v272, %v714
    %v717 = vmul.f32 %v272, %v715
    %v718 = vadd.f32 %v698, %v716
    %v719 = vadd.f32 %v699, %v717
    %v720 = vmul.f32 %v277, %v714
    %v721 = vmul.f32 %v277, %v715
    %v722 = vadd.f32 %v702, %v720
    %v723 = vadd.f32 %v703, %v721
    %v724 = vmul.f32 %v282, %v714
    %v725 = vmul.f32 %v282, %v715
    %v726 = vadd.f32 %v706, %v724
    %v727 = vadd.f32 %v707, %v725
    %728 = vrot.lane.b32.xlu0 %v590, 112
    %v729 = vpop.permute.xlu0 %728
    %730 = vrot.lane.b32.xlu0 %v591, 112
    %v731 = vpop.permute.xlu0 %730
    %v732 = vsel %vm291, %v729, %v731
    %v733 = vsel %vm291, %v731, %v729
    %v734 = vsel %vm95, %v732, 0.0
    %v735 = vsel %vm96, %v733, 0.0
    %v736 = vmul.f32 %v296, %v734
    %v737 = vmul.f32 %v296, %v735
    %v738 = vadd.f32 %v718, %v736
    %v739 = vadd.f32 %v719, %v737
    %v740 = vmul.f32 %v301, %v734
    %v741 = vmul.f32 %v301, %v735
    %v742 = vadd.f32 %v722, %v740
    %v743 = vadd.f32 %v723, %v741
    %v744 = vmul.f32 %v306, %v734
    %v745 = vmul.f32 %v306, %v735
    %v746 = vadd.f32 %v726, %v744
    %v747 = vadd.f32 %v727, %v745
    %748 = vrot.lane.b32.xlu0 %v590, 111
    %v749 = vpop.permute.xlu0 %748
    %750 = vrot.lane.b32.xlu0 %v591, 111
    %v751 = vpop.permute.xlu0 %750
    %v752 = vsel %vm315, %v749, %v751
    %v753 = vsel %vm315, %v751, %v749
    %v754 = vsel %vm99, %v752, 0.0
    %v755 = vsel %vm100, %v753, 0.0
    %v756 = vmul.f32 %v320, %v754
    %v757 = vmul.f32 %v320, %v755
    %v758 = vadd.f32 %v738, %v756
    %v759 = vadd.f32 %v739, %v757
    %v760 = vmul.f32 %v325, %v754
    %v761 = vmul.f32 %v325, %v755
    %v762 = vadd.f32 %v742, %v760
    %v763 = vadd.f32 %v743, %v761
    %v764 = vmul.f32 %v330, %v754
    %v765 = vmul.f32 %v330, %v755
    %v766 = vadd.f32 %v746, %v764
    %v767 = vadd.f32 %v747, %v765
    %768 = vrot.lane.b32.xlu0 %v594, 17
    %v769 = vpop.permute.xlu0 %768
    %770 = vrot.lane.b32.xlu0 %v595, 17
    %v771 = vpop.permute.xlu0 %770
    %v772 = vsel %vm132, %v769, %v771
    %v773 = vsel %vm132, %v771, %v769
    %v774 = vsel %vm89, %v773, 0.0
    %v775 = vsel %vm90, %v772, 0.0
    %v776 = vmul.f32 %v343, %v774
    %v777 = vmul.f32 %v343, %v775
    %v778 = vadd.f32 %v758, %v776
    %v779 = vadd.f32 %v759, %v777
    %v780 = vmul.f32 %v348, %v774
    %v781 = vmul.f32 %v348, %v775
    %v782 = vadd.f32 %v762, %v780
    %v783 = vadd.f32 %v763, %v781
    %v784 = vmul.f32 %v353, %v774
    %v785 = vmul.f32 %v353, %v775
    %v786 = vadd.f32 %v766, %v784
    %v787 = vadd.f32 %v767, %v785
    %788 = vrot.lane.b32.xlu0 %v594, 16
    %v789 = vpop.permute.xlu0 %788
    %790 = vrot.lane.b32.xlu0 %v595, 16
    %v791 = vpop.permute.xlu0 %790
    %v792 = vsel %vm156, %v789, %v791
    %v793 = vsel %vm156, %v791, %v789
    %v794 = vsel %vm85, %v793, 0.0
    %v795 = vsel %vm86, %v792, 0.0
    %v796 = vmul.f32 %v366, %v794
    %v797 = vmul.f32 %v366, %v795
    %v798 = vadd.f32 %v778, %v796
    %v799 = vadd.f32 %v779, %v797
    %v800 = vmul.f32 %v371, %v794
    %v801 = vmul.f32 %v371, %v795
    %v802 = vadd.f32 %v782, %v800
    %v803 = vadd.f32 %v783, %v801
    %v804 = vmul.f32 %v376, %v794
    %v805 = vmul.f32 %v376, %v795
    %v806 = vadd.f32 %v786, %v804
    %v807 = vadd.f32 %v787, %v805
    %808 = vrot.lane.b32.xlu0 %v594, 15
    %v809 = vpop.permute.xlu0 %808
    %810 = vrot.lane.b32.xlu0 %v595, 15
    %v811 = vpop.permute.xlu0 %810
    %v812 = vsel %vm180, %v809, %v811
    %v813 = vsel %vm180, %v811, %v809
    %v814 = vsel %vm93, %v813, 0.0
    %v815 = vsel %vm94, %v812, 0.0
    %v816 = vmul.f32 %v389, %v814
    %v817 = vmul.f32 %v389, %v815
    %v818 = vadd.f32 %v798, %v816
    %v819 = vadd.f32 %v799, %v817
    %v820 = vmul.f32 %v394, %v814
    %v821 = vmul.f32 %v394, %v815
    %v822 = vadd.f32 %v802, %v820
    %v823 = vadd.f32 %v803, %v821
    %v824 = vmul.f32 %v399, %v814
    %v825 = vmul.f32 %v399, %v815
    %v826 = vadd.f32 %v806, %v824
    %v827 = vadd.f32 %v807, %v825
    %828 = vrot.lane.b32.xlu0 %v594, 1
    %v829 = vpop.permute.xlu0 %828
    %830 = vrot.lane.b32.xlu0 %v595, 1
    %v831 = vpop.permute.xlu0 %830
    %v832 = vsel %vm204, %v829, %v831
    %v833 = vsel %vm204, %v831, %v829
    %v834 = vsel %vm87, %v833, 0.0
    %v835 = vsel %vm88, %v832, 0.0
    %v836 = vmul.f32 %v412, %v834
    %v837 = vmul.f32 %v412, %v835
    %v838 = vadd.f32 %v818, %v836
    %v839 = vadd.f32 %v819, %v837
    %v840 = vmul.f32 %v417, %v834
    %v841 = vmul.f32 %v417, %v835
    %v842 = vadd.f32 %v822, %v840
    %v843 = vadd.f32 %v823, %v841
    %v844 = vmul.f32 %v422, %v834
    %v845 = vmul.f32 %v422, %v835
    %v846 = vadd.f32 %v826, %v844
    %v847 = vadd.f32 %v827, %v845
    %v848 = vmul.f32 %v427, %v594
    %v849 = vmul.f32 %v427, %v595
    %v850 = vadd.f32 %v838, %v848
    %v851 = vadd.f32 %v839, %v849
    %v852 = vmul.f32 %v432, %v594
    %v853 = vmul.f32 %v432, %v595
    %v854 = vadd.f32 %v842, %v852
    %v855 = vadd.f32 %v843, %v853
    %v856 = vmul.f32 %v437, %v594
    %v857 = vmul.f32 %v437, %v595
    %v858 = vadd.f32 %v846, %v856
    %v859 = vadd.f32 %v847, %v857
    %860 = vrot.lane.b32.xlu0 %v594, 127
    %v861 = vpop.permute.xlu0 %860
    %862 = vrot.lane.b32.xlu0 %v595, 127
    %v863 = vpop.permute.xlu0 %862
    %v864 = vsel %vm243, %v861, %v863
    %v865 = vsel %vm243, %v863, %v861
    %v866 = vsel %vm91, %v864, 0.0
    %v867 = vsel %vm92, %v865, 0.0
    %v868 = vmul.f32 %v450, %v866
    %v869 = vmul.f32 %v450, %v867
    %v870 = vadd.f32 %v850, %v868
    %v871 = vadd.f32 %v851, %v869
    %v872 = vmul.f32 %v455, %v866
    %v873 = vmul.f32 %v455, %v867
    %v874 = vadd.f32 %v854, %v872
    %v875 = vadd.f32 %v855, %v873
    %v876 = vmul.f32 %v460, %v866
    %v877 = vmul.f32 %v460, %v867
    %v878 = vadd.f32 %v858, %v876
    %v879 = vadd.f32 %v859, %v877
    %880 = vrot.lane.b32.xlu0 %v594, 113
    %v881 = vpop.permute.xlu0 %880
    %882 = vrot.lane.b32.xlu0 %v595, 113
    %v883 = vpop.permute.xlu0 %882
    %v884 = vsel %vm267, %v881, %v883
    %v885 = vsel %vm267, %v883, %v881
    %v886 = vsel %vm97, %v884, 0.0
    %v887 = vsel %vm98, %v885, 0.0
    %v888 = vmul.f32 %v473, %v886
    %v889 = vmul.f32 %v473, %v887
    %v890 = vadd.f32 %v870, %v888
    %v891 = vadd.f32 %v871, %v889
    %v892 = vmul.f32 %v478, %v886
    %v893 = vmul.f32 %v478, %v887
    %v894 = vadd.f32 %v874, %v892
    %v895 = vadd.f32 %v875, %v893
    %v896 = vmul.f32 %v483, %v886
    %v897 = vmul.f32 %v483, %v887
    %v898 = vadd.f32 %v878, %v896
    %v899 = vadd.f32 %v879, %v897
    %900 = vrot.lane.b32.xlu0 %v594, 112
    %v901 = vpop.permute.xlu0 %900
    %902 = vrot.lane.b32.xlu0 %v595, 112
    %v903 = vpop.permute.xlu0 %902
    %v904 = vsel %vm291, %v901, %v903
    %v905 = vsel %vm291, %v903, %v901
    %v906 = vsel %vm95, %v904, 0.0
    %v907 = vsel %vm96, %v905, 0.0
    %v908 = vmul.f32 %v496, %v906
    %v909 = vmul.f32 %v496, %v907
    %v910 = vadd.f32 %v890, %v908
    %v911 = vadd.f32 %v891, %v909
    %v912 = vmul.f32 %v501, %v906
    %v913 = vmul.f32 %v501, %v907
    %v914 = vadd.f32 %v894, %v912
    %v915 = vadd.f32 %v895, %v913
    %v916 = vmul.f32 %v506, %v906
    %v917 = vmul.f32 %v506, %v907
    %v918 = vadd.f32 %v898, %v916
    %v919 = vadd.f32 %v899, %v917
    %920 = vrot.lane.b32.xlu0 %v594, 111
    %v921 = vpop.permute.xlu0 %920
    %922 = vrot.lane.b32.xlu0 %v595, 111
    %v923 = vpop.permute.xlu0 %922
    %v924 = vsel %vm315, %v921, %v923
    %v925 = vsel %vm315, %v923, %v921
    %v926 = vsel %vm99, %v924, 0.0
    %v927 = vsel %vm100, %v925, 0.0
    %v928 = vmul.f32 %v519, %v926
    %v929 = vmul.f32 %v519, %v927
    %v930 = vadd.f32 %v910, %v928
    %v931 = vadd.f32 %v911, %v929
    %v932 = vmul.f32 %v524, %v926
    %v933 = vmul.f32 %v524, %v927
    %v934 = vadd.f32 %v914, %v932
    %v935 = vadd.f32 %v915, %v933
    %v936 = vmul.f32 %v529, %v926
    %v937 = vmul.f32 %v529, %v927
    %v938 = vadd.f32 %v918, %v936
    %v939 = vadd.f32 %v919, %v937
    %v940 = vrot.slane %v938, 1
    %v941 = vrot.slane %v939, 1
    %v942 = vsel %vm101, %v940, 0.0
    %v943 = vsel %vm101, %v941, 0.0
    %v944 = vadd.f32 %v934, %v942
    %v945 = vadd.f32 %v935, %v943
    %v946 = vrot.slane %v930, 7
    %v947 = vrot.slane %v931, 7
    %v948 = vsel %vm102, %v946, 0.0
    %v949 = vsel %vm102, %v947, 0.0
    %v950 = vadd.f32 %v944, %v948
    %v951 = vadd.f32 %v945, %v949
    %v952 = vadd.f32 %v950, %v951
    %953 = vadd.xlane.f32.xlu0 %v952
    %v954 = vpop.xlane.xlu0 %953
    %v955 = vrot.slane %v954, 4
    %v956 = vadd.f32 %v954, %v955
    %v957 = vrot.slane %v956, 2
    %v958 = vadd.f32 %v956, %v957
    %v959 = vrot.slane %v958, 1
    %v960 = vadd.f32 %v958, %v959
    %s961 = vtos %v960
    %s962 = sadd.f32 %s556, %s961
    %v963 = vmul.f32 %v950, %v950
    %v964 = vmul.f32 %v951, %v951
    %v965 = vadd.f32 %v963, %v964
    %966 = vadd.xlane.f32.xlu0 %v965
    %v967 = vpop.xlane.xlu0 %966
    %v968 = vrot.slane %v967, 4
    %v969 = vadd.f32 %v967, %v968
    %v970 = vrot.slane %v969, 2
    %v971 = vadd.f32 %v969, %v970
    %v972 = vrot.slane %v971, 1
    %v973 = vadd.f32 %v971, %v972
    %s974 = vtos %v973
    %s975 = sadd.f32 %s569, %s974
    %v976 = vrcp.pop 4096.0
    %s977 = vtos %v976
    %s978 = smul.f32 %s962, %s977
    %v979 = vrcp.pop 4096.0
    %s980 = vtos %v979
    %s981 = smul.f32 %s975, %s980
    %s982 = smul.f32 %s978, %s978
    %s983 = ssub.f32 %s981, %s982
    %s984 = sadd.f32 %s983, 1e-05
    %v985 = vstv %s984
    %v986 = vrsqrt.pop %v985
    %s987 = vtos %v986
    %v988 = vstv %s978
    %v989 = vsub.f32 %v544, %v988
    %v990 = vsub.f32 %v545, %v988
    %v991 = vstv %s987
    %v992 = vmul.f32 %v989, %v991
    %v993 = vmul.f32 %v990, %v991
    %v994 = vxor.u32 %v992, 2147483648
    %v995 = vxor.u32 %v993, 2147483648
    %v996 = vmul.f32 %v994, 1.442695
    %v997 = vpow.pop %v996
    %v998 = vmul.f32 %v995, 1.442695
    %v999 = vpow.pop %v998
    %v1000 = vadd.f32 %v997, 1.0
    %v1001 = vadd.f32 %v999, 1.0
    %v1002 = vrcp.pop %v1000
    %v1003 = vmul.f32 1.0, %v1002
    %v1004 = vrcp.pop %v1001
    %v1005 = vmul.f32 1.0, %v1004
    %v1006 = vmul.f32 %v103, %v1003
    %v1007 = vmul.f32 %v104, %v1005
    %1008 = vst [vmem:[%s2] sm:$0xff] %v1006
    %1009 = vst [vmem:[%s2 + $0x8] sm:$0xff] %v1007
    %v1010 = vld [vmem:[%s105] sm:$0xff]
    %v1011 = vld [vmem:[%s105 + $0x8] sm:$0xff]
    %v1012 = vmul.f32 %v1010, %v1003
    %v1013 = vmul.f32 %v1011, %v1005
    %s1014 = scalar_lea.vmem %s2, 16
    %1015 = vst [vmem:[%s1014] sm:$0xff] %v1012
    %1016 = vst [vmem:[%s1014 + $0x8] sm:$0xff] %v1013
    %v1017 = vld [vmem:[%s112] sm:$0xff]
    %v1018 = vld [vmem:[%s112 + $0x8] sm:$0xff]
    %v1019 = vmul.f32 %v1017, %v1003
    %v1020 = vmul.f32 %v1018, %v1005
    %s1021 = scalar_lea.vmem %s2, 32
    %1022 = vst [vmem:[%s1021] sm:$0xff] %v1019
    %1023 = vst [vmem:[%s1021 + $0x8] sm:$0xff] %v1020
    %v1024 = vld [vmem:[%s119] sm:$0xff]
    %v1025 = vld [vmem:[%s119 + $0x8] sm:$0xff]
    %v1026 = vmul.f32 %v1024, %v1003
    %v1027 = vmul.f32 %v1025, %v1005
    %s1028 = scalar_lea.vmem %s2, 48
    %1029 = vst [vmem:[%s1028] sm:$0xff] %v1026
    %1030 = vst [vmem:[%s1028 + $0x8] sm:$0xff] %v1027
    %v1031 = vsub.f32 %v950, %v988
    %v1032 = vsub.f32 %v951, %v988
    %v1033 = vmul.f32 %v1031, %v991
    %v1034 = vmul.f32 %v1032, %v991
    %v1035 = vxor.u32 %v1033, 2147483648
    %v1036 = vxor.u32 %v1034, 2147483648
    %v1037 = vmul.f32 %v1035, 1.442695
    %v1038 = vpow.pop %v1037
    %v1039 = vmul.f32 %v1036, 1.442695
    %v1040 = vpow.pop %v1039
    %v1041 = vadd.f32 %v1038, 1.0
    %v1042 = vadd.f32 %v1040, 1.0
    %v1043 = vrcp.pop %v1041
    %v1044 = vmul.f32 1.0, %v1043
    %v1045 = vrcp.pop %v1042
    %v1046 = vmul.f32 1.0, %v1045
    %v1047 = vld [vmem:[%s570] sm:$0xff]
    %v1048 = vld [vmem:[%s570 + $0x8] sm:$0xff]
    %v1049 = vmul.f32 %v1047, %v1044
    %v1050 = vmul.f32 %v1048, %v1046
    %s1051 = scalar_lea.vmem %s2, 64
    %1052 = vst [vmem:[%s1051] sm:$0xff] %v1049
    %1053 = vst [vmem:[%s1051 + $0x8] sm:$0xff] %v1050
    %v1054 = vld [vmem:[%s573] sm:$0xff]
    %v1055 = vld [vmem:[%s573 + $0x8] sm:$0xff]
    %v1056 = vmul.f32 %v1054, %v1044
    %v1057 = vmul.f32 %v1055, %v1046
    %s1058 = scalar_lea.vmem %s2, 80
    %1059 = vst [vmem:[%s1058] sm:$0xff] %v1056
    %1060 = vst [vmem:[%s1058 + $0x8] sm:$0xff] %v1057
    %v1061 = vld [vmem:[%s580] sm:$0xff]
    %v1062 = vld [vmem:[%s580 + $0x8] sm:$0xff]
    %v1063 = vmul.f32 %v1061, %v1044
    %v1064 = vmul.f32 %v1062, %v1046
    %s1065 = scalar_lea.vmem %s2, 96
    %1066 = vst [vmem:[%s1065] sm:$0xff] %v1063
    %1067 = vst [vmem:[%s1065 + $0x8] sm:$0xff] %v1064
    %v1068 = vld [vmem:[%s587] sm:$0xff]
    %v1069 = vld [vmem:[%s587 + $0x8] sm:$0xff]
    %v1070 = vmul.f32 %v1068, %v1044
    %v1071 = vmul.f32 %v1069, %v1046
    %s1072 = scalar_lea.vmem %s2, 112
    %1073 = vst [vmem:[%s1072] sm:$0xff] %v1070
    %1074 = vst [vmem:[%s1072 + $0x8] sm:$0xff] %v1071
    // Predicated region
    $region14: #{c_forward.1} parent=1 // pred_check
      _
    $region15: #{c_forward.1} parent=1 // pred_check_branch
      %1076 = sbr.rel (0) target = $region17
    $region16: #{c_forward.1} parent=1 // pred_region
      _
    $region17: #{c_forward.1} parent=1 // pred_fallthru
      _
    // Predicated region
    $region18: #{c_forward.1} parent=1 // pred_check
      _
    $region19: #{c_forward.1} parent=1 // pred_check_branch
      %1078 = sbr.rel (0) target = $region21
    $region20: #{c_forward.1} parent=1 // pred_region
      _
    $region21: #{c_forward.1} parent=1 // pred_fallthru
      _
    %1079 = vsyncpa [#allocation3], 1

</llo_original>
